<compile_context>
chip_gen: v7x
topology: tpu7x:2x2x1
jax: 0.10.0
libtpu: 0.0.40
codegen_flags: <defaults>
</compile_context>

<pallas_src>
import jax
import jax.numpy as jnp
from jax.experimental import pallas as pl
from jax.experimental.pallas import tpu as pltpu


def _encoder_head_kernel(feat_ref, w_ref, b_ref, scale_ref, out_ref, acc_ref):
    # feat_ref : (TN, TC, HW) bf16  backbone feature slice (channel tile)
    # w_ref    : (TC, E_pad)  bf16  fc weight slice (contraction over channels)
    # b_ref    : (1,  E_pad)  f32   fc bias
    # scale_ref: (TN, E_pad)  f32   dropout scale (0.0/2.0 train, 1.0 eval)
    # out_ref  : (TN, E_pad)  f32
    # acc_ref  : (TN, E_pad)  f32   accumulator across channel tiles
    c = pl.program_id(1)

    @pl.when(c == 0)
    def _():
        acc_ref[...] = jnp.zeros_like(acc_ref)

    # Inception-v3 global average pool over spatial positions (f32 accumulation).
    pooled = jnp.mean(feat_ref[...].astype(jnp.float32), axis=-1)       # (TN, TC)

    # Partial replaced-fc contraction for this channel tile (MXU, f32 accumulate).
    acc_ref[...] += jnp.dot(pooled.astype(jnp.bfloat16), w_ref[...],
                            preferred_element_type=jnp.float32)

    @pl.when(c == pl.num_programs(1) - 1)
    def _():
        act = jnp.maximum(acc_ref[...] + b_ref[...], 0.0)                # + bias, ReLU
        out_ref[...] = (act * scale_ref[...]).astype(out_ref.dtype)      # Dropout(0.5)


def encoder_cnn_head(features_nchw, w, b, *, dropout_key=None, training=True,
                     tn=8, tc=512):
    """features_nchw: (N, C, H, W) f32 backbone features; w: (C, E); b: (E,)."""
    N, C, H, W = features_nchw.shape
    Cw, E = w.shape
    assert Cw == C
    HW = H * W

    # NCHW -> (N, C, HW): pure reshape, no data movement.  bf16 halves the
    # dominant HBM->VMEM transfer of the feature tensor.
    feat = features_nchw.reshape(N, C, HW).astype(jnp.bfloat16)

    # Lane-dense fc: pad the embedding axis up to a multiple of 128 lanes.
    e_pad = max(128, ((E + 127) // 128) * 128)
    w_p = jnp.pad(w, ((0, 0), (0, e_pad - E))).astype(jnp.bfloat16)
    b_p = jnp.pad(b, (0, e_pad - E)).reshape(1, e_pad).astype(jnp.float32)

    # Dropout(p=0.5): training-mode mask (zero w.p. 0.5, survivors scaled by 2),
    # generated once in the wrapper; eval mode is the identity.
    if training:
        if dropout_key is None:
            dropout_key = jax.random.PRNGKey(0)
        keep = jax.random.bernoulli(dropout_key, 0.5, (N, e_pad))
        scale = keep.astype(jnp.float32) * 2.0
    else:
        scale = jnp.ones((N, e_pad), jnp.float32)

    tn = min(tn, N)
    if C % tc != 0:
        tc = C                      # fall back to a single channel tile
    grid = (pl.cdiv(N, tn), C // tc)

    cost = pl.CostEstimate(
        flops=2 * N * C * e_pad + N * C * HW,
        transcendentals=0,
        bytes_accessed=(feat.size * 2 + w_p.size * 2 + b_p.size * 4
                        + scale.size * 4 + N * e_pad * 4),
    )

    out = pl.pallas_call(
        _encoder_head_kernel,
        out_shape=jax.ShapeDtypeStruct((N, e_pad), jnp.float32),
        grid_spec=pltpu.PrefetchScalarGridSpec(
            num_scalar_prefetch=0,
            grid=grid,
            in_specs=[
                pl.BlockSpec((tn, tc, HW), lambda i, c: (i, c, 0)),   # features
                pl.BlockSpec((tc, e_pad), lambda i, c: (c, 0)),       # fc weight
                pl.BlockSpec((1, e_pad), lambda i, c: (0, 0)),        # fc bias
                pl.BlockSpec((tn, e_pad), lambda i, c: (i, 0)),       # dropout scale
            ],
            out_specs=pl.BlockSpec((tn, e_pad), lambda i, c: (i, 0)),
            scratch_shapes=[pltpu.VMEM((tn, e_pad), jnp.float32)],
        ),
        compiler_params=pltpu.CompilerParams(
            dimension_semantics=("parallel", "arbitrary"),
            vmem_limit_bytes=32 * 1024 * 1024,
        ),
        cost_estimate=cost,
    )(feat, w_p, b_p, scale)

    return out[:, :E]


if __name__ == "__main__":
    key = jax.random.PRNGKey(0)
    k_feat, k_w, k_b, k_drop = jax.random.split(key, 4)

    # Inception-v3 pre-pool feature-map shape (small batch): (N, 2048, 8, 8).
    N, C, H, W = 2, 2048, 8, 8
    E = 32  # embedding_size

    features = jax.random.normal(k_feat, (N, C, H, W), dtype=jnp.float32)
    w = jax.random.normal(k_w, (C, E), dtype=jnp.float32) * 0.02
    b = jax.random.normal(k_b, (E,), dtype=jnp.float32) * 0.02

    out = encoder_cnn_head(features, w, b, dropout_key=k_drop, training=True)
    jax.block_until_ready(out)
    assert out.shape == (N, E) and out.dtype == jnp.float32
    print("KERNEL_OK")
</pallas_src>

<mosaic_0001>
module attributes {stable_mosaic.version = 11 : i64} {
  func.func @_encoder_head_kernel(%arg0: i32, %arg1: i32, %arg2: memref<2x512x64xbf16, #tpu.memory_space<vmem>>, %arg3: memref<512x128xbf16, #tpu.memory_space<vmem>>, %arg4: memref<1x128xf32, #tpu.memory_space<vmem>>, %arg5: memref<2x128xf32, #tpu.memory_space<vmem>>, %arg6: memref<2x128xf32, #tpu.memory_space<vmem>>, %arg7: memref<2x128xf32, #tpu.memory_space<vmem>>) attributes {dimension_semantics = [#tpu.dimension_semantics<parallel>, #tpu.dimension_semantics<arbitrary>], iteration_bounds = array<i64: 1, 4>, scalar_prefetch = 0 : i64, scratch_operands = 1 : i64, tpu.core_type = #tpu.core_type<tc>, window_params = [{transform_indices = @transform_0, window_bounds = array<i64: 2, 512, 64>}, {transform_indices = @transform_1, window_bounds = array<i64: 512, 128>}, {pipeline_mode = #tpu.pipeline_mode<synchronous>, transform_indices = @transform_2, window_bounds = array<i64: 1, 128>}, {transform_indices = @transform_3, window_bounds = array<i64: 2, 128>}, {transform_indices = @transform_4, window_bounds = array<i64: 2, 128>}]} {
    %c0_i32 = arith.constant 0 : i32
    %0 = arith.cmpi eq, %arg1, %c0_i32 : i32
    %1 = arith.extui %0 : i1 to i32
    %c0_i32_0 = arith.constant 0 : i32
    %2 = arith.cmpi ne, %1, %c0_i32_0 : i32
    scf.if %2 {
      %cst_12 = arith.constant 0.000000e+00 : f32
      %17 = vector.broadcast %cst_12 : f32 to vector<2x128xf32>
      %c0_13 = arith.constant 0 : index
      %c0_14 = arith.constant 0 : index
      %18 = vector.load %arg7[%c0_13, %c0_14] : memref<2x128xf32, #tpu.memory_space<vmem>>, vector<2x128xf32>
      tpu.vector_store %arg7[%c0_13, %c0_14], %17 {strides = array<i32>} : memref<2x128xf32, #tpu.memory_space<vmem>>, vector<2x128xf32>,
    } else {
    }
    %c0 = arith.constant 0 : index
    %c0_1 = arith.constant 0 : index
    %c0_2 = arith.constant 0 : index
    %3 = vector.load %arg2[%c0, %c0_1, %c0_2] : memref<2x512x64xbf16, #tpu.memory_space<vmem>>, vector<2x512x64xbf16>
    %4 = arith.extf %3 : vector<2x512x64xbf16> to vector<2x512x64xf32>
    %cst = arith.constant dense<0.000000e+00> : vector<2x512xf32>
    %5 = vector.multi_reduction <add>, %4, %cst [2] : vector<2x512x64xf32> to vector<2x512xf32>
    %cst_3 = arith.constant 6.400000e+01 : f32
    %6 = vector.broadcast %cst_3 : f32 to vector<2x512xf32>
    %7 = arith.divf %5, %6 : vector<2x512xf32>
    %c0_4 = arith.constant 0 : index
    %c0_5 = arith.constant 0 : index
    %8 = vector.load %arg7[%c0_4, %c0_5] : memref<2x128xf32, #tpu.memory_space<vmem>>, vector<2x128xf32>
    %9 = arith.truncf %7 : vector<2x512xf32> to vector<2x512xbf16>
    %c0_6 = arith.constant 0 : index
    %c0_7 = arith.constant 0 : index
    %10 = vector.load %arg3[%c0_6, %c0_7] : memref<512x128xbf16, #tpu.memory_space<vmem>>, vector<512x128xbf16>
    %cst_8 = arith.constant dense<0.000000e+00> : vector<2x128xf32>
    %11 = tpu.matmul %9, %10, %cst_8 {dimension_numbers = #tpu.dot_dimension_numbers<[1], [0], [0], [1], [0, 0, 1, 1], [], []>} : vector<2x512xbf16>, vector<512x128xbf16>, vector<2x128xf32> -> vector<2x128xf32>
    %12 = arith.addf %8, %11 : vector<2x128xf32>
    %c0_9 = arith.constant 0 : index
    %c0_10 = arith.constant 0 : index
    %13 = vector.load %arg7[%c0_9, %c0_10] : memref<2x128xf32, #tpu.memory_space<vmem>>, vector<2x128xf32>
    tpu.vector_store %arg7[%c0_9, %c0_10], %12 {strides = array<i32>} : memref<2x128xf32, #tpu.memory_space<vmem>>, vector<2x128xf32>,
    %c3_i32 = arith.constant 3 : i32
    %14 = arith.cmpi eq, %arg1, %c3_i32 : i32
    %15 = arith.extui %14 : i1 to i32
    %c0_i32_11 = arith.constant 0 : i32
    %16 = arith.cmpi ne, %15, %c0_i32_11 : i32
    scf.if %16 {
      %c0_12 = arith.constant 0 : index
      %c0_13 = arith.constant 0 : index
      %17 = vector.load %arg7[%c0_12, %c0_13] : memref<2x128xf32, #tpu.memory_space<vmem>>, vector<2x128xf32>
      %c0_14 = arith.constant 0 : index
      %c0_15 = arith.constant 0 : index
      %18 = vector.load %arg4[%c0_14, %c0_15] : memref<1x128xf32, #tpu.memory_space<vmem>>, vector<1x128xf32>
      %19 = vector.broadcast %18 : vector<1x128xf32> to vector<2x128xf32>
      %20 = arith.addf %17, %19 : vector<2x128xf32>
      %cst_16 = arith.constant 0.000000e+00 : f32
      %21 = vector.broadcast %cst_16 : f32 to vector<2x128xf32>
      %22 = arith.maximumf %20, %21 : vector<2x128xf32>
      %c0_17 = arith.constant 0 : index
      %c0_18 = arith.constant 0 : index
      %23 = vector.load %arg5[%c0_17, %c0_18] : memref<2x128xf32, #tpu.memory_space<vmem>>, vector<2x128xf32>
      %24 = arith.mulf %22, %23 : vector<2x128xf32>
      %c0_19 = arith.constant 0 : index
      %c0_20 = arith.constant 0 : index
      %25 = vector.load %arg6[%c0_19, %c0_20] : memref<2x128xf32, #tpu.memory_space<vmem>>, vector<2x128xf32>
      tpu.vector_store %arg6[%c0_19, %c0_20], %24 {strides = array<i32>} : memref<2x128xf32, #tpu.memory_space<vmem>>, vector<2x128xf32>,
    } else {
    }
    return
  }
  func.func @transform_0(%arg0: i32, %arg1: i32) -> (i32, i32, i32) {
    %c0_i32 = arith.constant 0 : i32
    %c0_i32_0 = arith.constant 0 : i32
    return %arg0, %arg1, %c0_i32 : i32, i32, i32
  }
  func.func @transform_1(%arg0: i32, %arg1: i32) -> (i32, i32) {
    %c0_i32 = arith.constant 0 : i32
    %c0_i32_0 = arith.constant 0 : i32
    return %arg1, %c0_i32 : i32, i32
  }
  func.func @transform_2(%arg0: i32, %arg1: i32) -> (i32, i32) {
    %c0_i32 = arith.constant 0 : i32
    %c0_i32_0 = arith.constant 0 : i32
    %c0_i32_1 = arith.constant 0 : i32
    return %c0_i32, %c0_i32_0 : i32, i32
  }
  func.func @transform_3(%arg0: i32, %arg1: i32) -> (i32, i32) {
    %c0_i32 = arith.constant 0 : i32
    %c0_i32_0 = arith.constant 0 : i32
    return %arg0, %c0_i32 : i32, i32
  }
  func.func @transform_4(%arg0: i32, %arg1: i32) -> (i32, i32) {
    %c0_i32 = arith.constant 0 : i32
    %c0_i32_0 = arith.constant 0 : i32
    return %arg0, %c0_i32 : i32, i32
  }
}

</mosaic_0001>

<llo_original>
// kernel: tpu_custom_call.1
$region0: #{tpu_custom_call.1}
  #allocation0 [shape = 'u32[]', space=smem, size = 0x4, offset = 0x4, fixed_abs, tag = 'smem constant byte address 0x4 - core index']
  #allocation1 [shape = 'u32[144,128]{1,0:T(1,128)}', space=vmem, size = 0x12000, scoped, tag = 'internal scratch']
  #allocation2 [shape = 'f32[2,128]{1,0:T(2,128)}', space=vmem, size = 0x400, scoped, tag = 'scratch operand']
  %s0 = inlined_call_operand.vmem [shape: bf16[2,2048,64], index: 0, kind: input, shape index: {}]
  %s1 = inlined_call_operand.vmem [shape: bf16[2048,128], index: 1, kind: input, shape index: {}]
  %s2 = inlined_call_operand.vmem [shape: f32[1,128], index: 2, kind: input, shape index: {}]
  %s3 = inlined_call_operand.vmem [shape: f32[2,128], index: 3, kind: input, shape index: {}]
  %s4 = inlined_call_operand.hbm [shape: f32[2,128], index: 4, kind: output, shape index: {}]
  %s5 = sld [smem:[#allocation0]]
  $region98: #{tpu_custom_call.1} parent=0
    _
  %s7 = ssub.s32 1, %s5
  %s8 = scalar_select 0, %s7, %s5
  $region1: #{tpu_custom_call.1} parent=0
    #allocation3 [shape = 'u8[524288]{0}', space=vmem, size = 0x80000, scoped, tag = 'input window, operand 0']
    #allocation4 [shape = 'u8[1024]{0}', space=vmem, size = 0x400, scoped, tag = 'output window, operand 0, single buffered']
    #allocation5 [shape = 's32[2]{0}', space=sflag, size = 0x8, scoped, tag = 'scoped memory for tpu_custom_call.1']
    %9 = vsyncpa [#allocation5], 0
    loop: start=0, step=1, limit=6
    $region2: #{tpu_custom_call.1} parent=1 // loop_pre_header
      _
    $region3: #{tpu_custom_call.1} parent=1 // loop_header
      %s11 = sphi 0, %s15
      %p12 = scmp.ge.s32.totalorder %s11, 6
      %s18 = sphi 0, %s30
      %s19 = sphi 0, %s26
      %s20 = sphi 0, %s18
      %s21 = sphi 0, %s19
      %s22 = sphi 0, %s20
      %s23 = sphi 0, %s21
      %s35 = sphi 0, %s37
      %s38 = sphi 0, %s35
      %s39 = sphi 0, %s38
      %s55 = sphi 0, %s39
      %s61 = sphi 0, %s63
      %s64 = sphi 0, %s61
      %s65 = sphi 0, %s64
      %s81 = sphi 0, %s65
      %s85 = sphi 0, %s85
      %s87 = sphi 0, %s85
      %s88 = sphi 0, %s87
      %s102 = sphi 0, %s88
      %s108 = sphi 0, %s110
      %s111 = sphi 0, %s108
      %s112 = sphi 0, %s111
      %s128 = sphi 0, %s112
      %s134 = sphi 0, %s136
      %s137 = sphi 0, %s134
      %s138 = sphi 0, %s137
      %s154 = sphi 0, %s138
    $region4: #{tpu_custom_call.1} parent=1 // loop_header_branch
      %14 = sbr.rel (%p12) target = $region8
    $region5: #{tpu_custom_call.1} parent=1 // loop_body
      %s16 = ssub.s32 %s11, 1
      %s17 = ssub.s32 %s11, 2
      %s24 = sadd.s32 1, %s19
      %p25 = scmp.ge.s32.totalorder %s24, 4
      %s26 = scalar_select %p25, 0, %s24
      %s27 = sadd.s32 1, %s18
      %s28 = scalar_select %p25, %s27, %s18
      %p29 = scmp.ge.s32.totalorder %s28, 1
      %s30 = scalar_select %p29, 0, %s28
      %s31 = ssub.s32 %s18, %s30
      %s32 = ssub.s32 %s19, %s26
      %s33 = sor.u32 %s31, %s32
      %p34 = scmp.eq.s32.totalorder %s33, 0
      %s36 = sadd.s32 %s35, 1
      %s37 = scalar_select %p34, %s35, %s36
      %p40 = pneg %p34
      %p41 = scmp.eq.s32.totalorder %s11, 3
      %p42 = por %p40, %p41
      %p43 = scmp.ne.s32.totalorder %s35, %s38
      %p44 = scmp.eq.s32.totalorder %s11, 0
      %p45 = por %p43, %p44
      %p46 = scmp.ne.s32.totalorder %s35, %s38
      %p47 = scmp.eq.s32.totalorder %s16, 3
      %p48 = por %p46, %p47
      %p49 = scmp.ne.s32.totalorder %s38, %s39
      %p50 = scmp.eq.s32.totalorder %s16, 0
      %p51 = por %p49, %p50
      %p52 = scmp.ne.s32.totalorder %s38, %s39
      %p53 = scmp.eq.s32.totalorder %s17, 3
      %p54 = por %p52, %p53
      %p56 = scmp.ne.s32.totalorder %s39, %s55
      %p57 = scmp.eq.s32.totalorder %s17, 0
      %p58 = por %p56, %p57
      %s59 = ssub.s32 %s19, %s26
      %p60 = scmp.eq.s32.totalorder %s59, 0
      %s62 = sadd.s32 %s61, 1
      %s63 = scalar_select %p60, %s61, %s62
      %p66 = pneg %p60
      %p67 = scmp.eq.s32.totalorder %s11, 3
      %p68 = por %p66, %p67
      %p69 = scmp.ne.s32.totalorder %s61, %s64
      %p70 = scmp.eq.s32.totalorder %s11, 0
      %p71 = por %p69, %p70
      %p72 = scmp.ne.s32.totalorder %s61, %s64
      %p73 = scmp.eq.s32.totalorder %s16, 3
      %p74 = por %p72, %p73
      %p75 = scmp.ne.s32.totalorder %s64, %s65
      %p76 = scmp.eq.s32.totalorder %s16, 0
      %p77 = por %p75, %p76
      %p78 = scmp.ne.s32.totalorder %s64, %s65
      %p79 = scmp.eq.s32.totalorder %s17, 3
      %p80 = por %p78, %p79
      %p82 = scmp.ne.s32.totalorder %s65, %s81
      %p83 = scmp.eq.s32.totalorder %s17, 0
      %p84 = por %p82, %p83
      %s86 = sadd.s32 %s85, 1
      %p89 = scmp.eq.s32.totalorder %s11, 3
      %p90 = scmp.ne.s32.totalorder %s85, %s87
      %p91 = scmp.eq.s32.totalorder %s11, 0
      %p92 = por %p90, %p91
      %p93 = scmp.ne.s32.totalorder %s85, %s87
      %p94 = scmp.eq.s32.totalorder %s16, 3
      %p95 = por %p93, %p94
      %p96 = scmp.ne.s32.totalorder %s87, %s88
      %p97 = scmp.eq.s32.totalorder %s16, 0
      %p98 = por %p96, %p97
      %p99 = scmp.ne.s32.totalorder %s87, %s88
      %p100 = scmp.eq.s32.totalorder %s17, 3
      %p101 = por %p99, %p100
      %p103 = scmp.ne.s32.totalorder %s88, %s102
      %p104 = scmp.eq.s32.totalorder %s17, 0
      %p105 = por %p103, %p104
      %s106 = ssub.s32 %s18, %s30
      %p107 = scmp.eq.s32.totalorder %s106, 0
      %s109 = sadd.s32 %s108, 1
      %s110 = scalar_select %p107, %s108, %s109
      %p113 = pneg %p107
      %p114 = scmp.eq.s32.totalorder %s11, 3
      %p115 = por %p113, %p114
      %p116 = scmp.ne.s32.totalorder %s108, %s111
      %p117 = scmp.eq.s32.totalorder %s11, 0
      %p118 = por %p116, %p117
      %p119 = scmp.ne.s32.totalorder %s108, %s111
      %p120 = scmp.eq.s32.totalorder %s16, 3
      %p121 = por %p119, %p120
      %p122 = scmp.ne.s32.totalorder %s111, %s112
      %p123 = scmp.eq.s32.totalorder %s16, 0
      %p124 = por %p122, %p123
      %p125 = scmp.ne.s32.totalorder %s111, %s112
      %p126 = scmp.eq.s32.totalorder %s17, 3
      %p127 = por %p125, %p126
      %p129 = scmp.ne.s32.totalorder %s112, %s128
      %p130 = scmp.eq.s32.totalorder %s17, 0
      %p131 = por %p129, %p130
      %s132 = ssub.s32 %s18, %s30
      %p133 = scmp.eq.s32.totalorder %s132, 0
      %s135 = sadd.s32 %s134, 1
      %s136 = scalar_select %p133, %s134, %s135
      %p139 = pneg %p133
      %p140 = scmp.eq.s32.totalorder %s11, 3
      %p141 = por %p139, %p140
      %p142 = scmp.ne.s32.totalorder %s134, %s137
      %p143 = scmp.eq.s32.totalorder %s11, 0
      %p144 = por %p142, %p143
      %p145 = scmp.ne.s32.totalorder %s134, %s137
      %p146 = scmp.eq.s32.totalorder %s16, 3
      %p147 = por %p145, %p146
      %p148 = scmp.ne.s32.totalorder %s137, %s138
      %p149 = scmp.eq.s32.totalorder %s16, 0
      %p150 = por %p148, %p149
      %p151 = scmp.ne.s32.totalorder %s137, %s138
      %p152 = scmp.eq.s32.totalorder %s17, 3
      %p153 = por %p151, %p152
      %p155 = scmp.ne.s32.totalorder %s138, %s154
      %p156 = scmp.eq.s32.totalorder %s17, 0
      %p157 = por %p155, %p156
      %p158 = scmp.le.s32.totalorder 1, %s11
      %p159 = scmp.lt.s32.totalorder %s11, 5
      %p160 = pnand %p158, %p159
      %p161 = pneg %p160
      // Predicated region
      $region9: #{tpu_custom_call.1} parent=5 // pred_check
        _
      $region10: #{tpu_custom_call.1} parent=5 // pred_check_branch
        %163 = sbr.rel (%p160) target = $region12
      $region11: #{tpu_custom_call.1} parent=5 // pred_region
        %s164 = ssub.s32 %s11, 1
        // Predicated region
        $region13: #{tpu_custom_call.1} parent=11 // pred_check
          %p165 = pneg %p98
        $region14: #{tpu_custom_call.1} parent=11 // pred_check_branch
          %167 = sbr.rel (%p165) target = $region16
        $region15: #{tpu_custom_call.1} parent=11 // pred_region
          _
        $region16: #{tpu_custom_call.1} parent=11 // pred_fallthru
          _
        // Predicated region
        $region17: #{tpu_custom_call.1} parent=11 // pred_check
          %p168 = pneg %p124
        $region18: #{tpu_custom_call.1} parent=11 // pred_check_branch
          %170 = sbr.rel (%p168) target = $region20
        $region19: #{tpu_custom_call.1} parent=11 // pred_region
          %p171 = scmp.lt.s32.totalorder %s20, 0
          %s172 = scalar_select %p171, %s20, 0
          %s173 = smul.addr %s172, 2
          %s174 = scalar_lea.vmem %s3, %s173
        $region20: #{tpu_custom_call.1} parent=11 // pred_fallthru
          _
      $region12: #{tpu_custom_call.1} parent=5 // pred_fallthru
        _
      %p175 = scmp.lt.s32.totalorder %s11, 4
      // Predicated region
      $region21: #{tpu_custom_call.1} parent=5 // pred_check
        %p176 = pneg %p175
      $region22: #{tpu_custom_call.1} parent=5 // pred_check_branch
        %178 = sbr.rel (%p176) target = $region24
      $region23: #{tpu_custom_call.1} parent=5 // pred_region
        // Predicated region
        $region25: #{tpu_custom_call.1} parent=23 // pred_check
          %p179 = pneg %p45
        $region26: #{tpu_custom_call.1} parent=23 // pred_check_branch
          %181 = sbr.rel (%p179) target = $region28
        $region27: #{tpu_custom_call.1} parent=23 // pred_region
          %s182 = sand.u32 %s35, 1
          %s183 = sand.u32 %s35, 1
          %s184 = smul.addr %s183, 512
          %s185 = scalar_lea.vmem [#allocation3], %s184
          %s186 = smul.u32 2, %s18
          %s187 = smul.u32 64, %s19
          %s188 = smul.addr %s186, 256
          %s189 = sadd.s32 %s187, %s188
          %s190 = smul.addr %s189, 4
          %s191 = scalar_lea.vmem %s0, %s190
          // Predicated region
          $region29: #{tpu_custom_call.1} parent=27 // pred_check
            _
          $region30: #{tpu_custom_call.1} parent=27 // pred_check_branch
            %193 = sbr.rel (0) target = $region32
          $region31: #{tpu_custom_call.1} parent=27 // pred_region
            // Predicated region
            $region33: #{tpu_custom_call.1} parent=31 // pred_check
              _
            $region34: #{tpu_custom_call.1} parent=31 // pred_check_branch
              %195 = sbr.rel target = $region36
            $region35: #{tpu_custom_call.1} parent=31 // pred_region
              // Predicated region
              $region48: #{tpu_custom_call.1} parent=35 // pred_check
                _
              $region49: #{tpu_custom_call.1} parent=35 // pred_check_branch
                %464 = sbr.rel (0) target = $region51
              $region50: #{tpu_custom_call.1} parent=35 // pred_region
                loop: start=0, step=1, limit=1
                $region52: #{tpu_custom_call.1} parent=50 // loop_pre_header
                  _
                $region53: #{tpu_custom_call.1} parent=50 // loop_header
                  %s466 = sphi 0, %s470
                  %p467 = scmp.ge.s32.totalorder %s466, 1
                  %s471 = sphi %s191, %s191
                  %s472 = sphi %s185, %s185
                $region54: #{tpu_custom_call.1} parent=50 // loop_header_branch
                  %469 = sbr.rel (%p467) target = $region58
                $region55: #{tpu_custom_call.1} parent=50 // loop_body
                  _
                $region56: #{tpu_custom_call.1} parent=50 // loop_footer
                  %s470 = sadd.s32 1, %s466
                $region57: #{tpu_custom_call.1} parent=50 // loop_footer_branch
                  %465 = sbr.rel target = $region53
                $region58: #{tpu_custom_call.1} parent=50 // loop_exit
                  _
                loop: start=0, step=1, limit=1
                $region59: #{tpu_custom_call.1} parent=50 // loop_pre_header
                  _
                $region60: #{tpu_custom_call.1} parent=50 // loop_header
                  %s475 = sphi 0, %s479
                  %p476 = scmp.ge.s32.totalorder %s475, 1
                  %s480 = sphi %s191, %s191
                  %s481 = sphi %s185, %s185
                $region61: #{tpu_custom_call.1} parent=50 // loop_header_branch
                  %478 = sbr.rel (%p476) target = $region65
                $region62: #{tpu_custom_call.1} parent=50 // loop_body
                  %v482 = vld [vmem:[%s480] sm:$0xf]
                  %483 = vst [vmem:[%s481] sm:$0xf] %v482
                  %v484 = vld [vmem:[%s480 + $0x4] sm:$0xf]
                  %485 = vst [vmem:[%s481 + $0x4] sm:$0xf] %v484
                  %v486 = vld [vmem:[%s480 + $0x8] sm:$0xf]
                  %487 = vst [vmem:[%s481 + $0x8] sm:$0xf] %v486
                  %v488 = vld [vmem:[%s480 + $0xc] sm:$0xf]
                  %489 = vst [vmem:[%s481 + $0xc] sm:$0xf] %v488
                  %v490 = vld [vmem:[%s480 + $0x10] sm:$0xf]
                  %491 = vst [vmem:[%s481 + $0x10] sm:$0xf] %v490
                  %v492 = vld [vmem:[%s480 + $0x14] sm:$0xf]
                  %493 = vst [vmem:[%s481 + $0x14] sm:$0xf] %v492
                  %v494 = vld [vmem:[%s480 + $0x18] sm:$0xf]
                  %495 = vst [vmem:[%s481 + $0x18] sm:$0xf] %v494
                  %v496 = vld [vmem:[%s480 + $0x1c] sm:$0xf]
                  %497 = vst [vmem:[%s481 + $0x1c] sm:$0xf] %v496
                  %v498 = vld [vmem:[%s480 + $0x20] sm:$0xf]
                  %499 = vst [vmem:[%s481 + $0x20] sm:$0xf] %v498
                  %v500 = vld [vmem:[%s480 + $0x24] sm:$0xf]
                  %501 = vst [vmem:[%s481 + $0x24] sm:$0xf] %v500
                  %v502 = vld [vmem:[%s480 + $0x28] sm:$0xf]
                  %503 = vst [vmem:[%s481 + $0x28] sm:$0xf] %v502
                  %v504 = vld [vmem:[%s480 + $0x2c] sm:$0xf]
                  %505 = vst [vmem:[%s481 + $0x2c] sm:$0xf] %v504
                  %v506 = vld [vmem:[%s480 + $0x30] sm:$0xf]
                  %507 = vst [vmem:[%s481 + $0x30] sm:$0xf] %v506
                  %v508 = vld [vmem:[%s480 + $0x34] sm:$0xf]
                  %509 = vst [vmem:[%s481 + $0x34] sm:$0xf] %v508
                  %v510 = vld [vmem:[%s480 + $0x38] sm:$0xf]
                  %511 = vst [vmem:[%s481 + $0x38] sm:$0xf] %v510
                  %v512 = vld [vmem:[%s480 + $0x3c] sm:$0xf]
                  %513 = vst [vmem:[%s481 + $0x3c] sm:$0xf] %v512
                  %v514 = vld [vmem:[%s480 + $0x40] sm:$0xf]
                  %515 = vst [vmem:[%s481 + $0x40] sm:$0xf] %v514
                  %v516 = vld [vmem:[%s480 + $0x44] sm:$0xf]
                  %517 = vst [vmem:[%s481 + $0x44] sm:$0xf] %v516
                  %v518 = vld [vmem:[%s480 + $0x48] sm:$0xf]
                  %519 = vst [vmem:[%s481 + $0x48] sm:$0xf] %v518
                  %v520 = vld [vmem:[%s480 + $0x4c] sm:$0xf]
                  %521 = vst [vmem:[%s481 + $0x4c] sm:$0xf] %v520
                  %v522 = vld [vmem:[%s480 + $0x50] sm:$0xf]
                  %523 = vst [vmem:[%s481 + $0x50] sm:$0xf] %v522
                  %v524 = vld [vmem:[%s480 + $0x54] sm:$0xf]
                  %525 = vst [vmem:[%s481 + $0x54] sm:$0xf] %v524
                  %v526 = vld [vmem:[%s480 + $0x58] sm:$0xf]
                  %527 = vst [vmem:[%s481 + $0x58] sm:$0xf] %v526
                  %v528 = vld [vmem:[%s480 + $0x5c] sm:$0xf]
                  %529 = vst [vmem:[%s481 + $0x5c] sm:$0xf] %v528
                  %v530 = vld [vmem:[%s480 + $0x60] sm:$0xf]
                  %531 = vst [vmem:[%s481 + $0x60] sm:$0xf] %v530
                  %v532 = vld [vmem:[%s480 + $0x64] sm:$0xf]
                  %533 = vst [vmem:[%s481 + $0x64] sm:$0xf] %v532
                  %v534 = vld [vmem:[%s480 + $0x68] sm:$0xf]
                  %535 = vst [vmem:[%s481 + $0x68] sm:$0xf] %v534
                  %v536 = vld [vmem:[%s480 + $0x6c] sm:$0xf]
                  %537 = vst [vmem:[%s481 + $0x6c] sm:$0xf] %v536
                  %v538 = vld [vmem:[%s480 + $0x70] sm:$0xf]
                  %539 = vst [vmem:[%s481 + $0x70] sm:$0xf] %v538
                  %v540 = vld [vmem:[%s480 + $0x74] sm:$0xf]
                  %541 = vst [vmem:[%s481 + $0x74] sm:$0xf] %v540
                  %v542 = vld [vmem:[%s480 + $0x78] sm:$0xf]
                  %543 = vst [vmem:[%s481 + $0x78] sm:$0xf] %v542
                  %v544 = vld [vmem:[%s480 + $0x7c] sm:$0xf]
                  %545 = vst [vmem:[%s481 + $0x7c] sm:$0xf] %v544
                  %v546 = vld [vmem:[%s480 + $0x80] sm:$0xf]
                  %547 = vst [vmem:[%s481 + $0x80] sm:$0xf] %v546
                  %v548 = vld [vmem:[%s480 + $0x84] sm:$0xf]
                  %549 = vst [vmem:[%s481 + $0x84] sm:$0xf] %v548
                  %v550 = vld [vmem:[%s480 + $0x88] sm:$0xf]
                  %551 = vst [vmem:[%s481 + $0x88] sm:$0xf] %v550
                  %v552 = vld [vmem:[%s480 + $0x8c] sm:$0xf]
                  %553 = vst [vmem:[%s481 + $0x8c] sm:$0xf] %v552
                  %v554 = vld [vmem:[%s480 + $0x90] sm:$0xf]
                  %555 = vst [vmem:[%s481 + $0x90] sm:$0xf] %v554
                  %v556 = vld [vmem:[%s480 + $0x94] sm:$0xf]
                  %557 = vst [vmem:[%s481 + $0x94] sm:$0xf] %v556
                  %v558 = vld [vmem:[%s480 + $0x98] sm:$0xf]
                  %559 = vst [vmem:[%s481 + $0x98] sm:$0xf] %v558
                  %v560 = vld [vmem:[%s480 + $0x9c] sm:$0xf]
                  %561 = vst [vmem:[%s481 + $0x9c] sm:$0xf] %v560
                  %v562 = vld [vmem:[%s480 + $0xa0] sm:$0xf]
                  %563 = vst [vmem:[%s481 + $0xa0] sm:$0xf] %v562
                  %v564 = vld [vmem:[%s480 + $0xa4] sm:$0xf]
                  %565 = vst [vmem:[%s481 + $0xa4] sm:$0xf] %v564
                  %v566 = vld [vmem:[%s480 + $0xa8] sm:$0xf]
                  %567 = vst [vmem:[%s481 + $0xa8] sm:$0xf] %v566
                  %v568 = vld [vmem:[%s480 + $0xac] sm:$0xf]
                  %569 = vst [vmem:[%s481 + $0xac] sm:$0xf] %v568
                  %v570 = vld [vmem:[%s480 + $0xb0] sm:$0xf]
                  %571 = vst [vmem:[%s481 + $0xb0] sm:$0xf] %v570
                  %v572 = vld [vmem:[%s480 + $0xb4] sm:$0xf]
                  %573 = vst [vmem:[%s481 + $0xb4] sm:$0xf] %v572
                  %v574 = vld [vmem:[%s480 + $0xb8] sm:$0xf]
                  %575 = vst [vmem:[%s481 + $0xb8] sm:$0xf] %v574
                  %v576 = vld [vmem:[%s480 + $0xbc] sm:$0xf]
                  %577 = vst [vmem:[%s481 + $0xbc] sm:$0xf] %v576
                  %v578 = vld [vmem:[%s480 + $0xc0] sm:$0xf]
                  %579 = vst [vmem:[%s481 + $0xc0] sm:$0xf] %v578
                  %v580 = vld [vmem:[%s480 + $0xc4] sm:$0xf]
                  %581 = vst [vmem:[%s481 + $0xc4] sm:$0xf] %v580
                  %v582 = vld [vmem:[%s480 + $0xc8] sm:$0xf]
                  %583 = vst [vmem:[%s481 + $0xc8] sm:$0xf] %v582
                  %v584 = vld [vmem:[%s480 + $0xcc] sm:$0xf]
                  %585 = vst [vmem:[%s481 + $0xcc] sm:$0xf] %v584
                  %v586 = vld [vmem:[%s480 + $0xd0] sm:$0xf]
                  %587 = vst [vmem:[%s481 + $0xd0] sm:$0xf] %v586
                  %v588 = vld [vmem:[%s480 + $0xd4] sm:$0xf]
                  %589 = vst [vmem:[%s481 + $0xd4] sm:$0xf] %v588
                  %v590 = vld [vmem:[%s480 + $0xd8] sm:$0xf]
                  %591 = vst [vmem:[%s481 + $0xd8] sm:$0xf] %v590
                  %v592 = vld [vmem:[%s480 + $0xdc] sm:$0xf]
                  %593 = vst [vmem:[%s481 + $0xdc] sm:$0xf] %v592
                  %v594 = vld [vmem:[%s480 + $0xe0] sm:$0xf]
                  %595 = vst [vmem:[%s481 + $0xe0] sm:$0xf] %v594
                  %v596 = vld [vmem:[%s480 + $0xe4] sm:$0xf]
                  %597 = vst [vmem:[%s481 + $0xe4] sm:$0xf] %v596
                  %v598 = vld [vmem:[%s480 + $0xe8] sm:$0xf]
                  %599 = vst [vmem:[%s481 + $0xe8] sm:$0xf] %v598
                  %v600 = vld [vmem:[%s480 + $0xec] sm:$0xf]
                  %601 = vst [vmem:[%s481 + $0xec] sm:$0xf] %v600
                  %v602 = vld [vmem:[%s480 + $0xf0] sm:$0xf]
                  %603 = vst [vmem:[%s481 + $0xf0] sm:$0xf] %v602
                  %v604 = vld [vmem:[%s480 + $0xf4] sm:$0xf]
                  %605 = vst [vmem:[%s481 + $0xf4] sm:$0xf] %v604
                  %v606 = vld [vmem:[%s480 + $0xf8] sm:$0xf]
                  %607 = vst [vmem:[%s481 + $0xf8] sm:$0xf] %v606
                  %v608 = vld [vmem:[%s480 + $0xfc] sm:$0xf]
                  %609 = vst [vmem:[%s481 + $0xfc] sm:$0xf] %v608
                  %v610 = vld [vmem:[%s480 + $0x400] sm:$0xf]
                  %611 = vst [vmem:[%s481 + $0x100] sm:$0xf] %v610
                  %v612 = vld [vmem:[%s480 + $0x404] sm:$0xf]
                  %613 = vst [vmem:[%s481 + $0x104] sm:$0xf] %v612
                  %v614 = vld [vmem:[%s480 + $0x408] sm:$0xf]
                  %615 = vst [vmem:[%s481 + $0x108] sm:$0xf] %v614
                  %v616 = vld [vmem:[%s480 + $0x40c] sm:$0xf]
                  %617 = vst [vmem:[%s481 + $0x10c] sm:$0xf] %v616
                  %v618 = vld [vmem:[%s480 + $0x410] sm:$0xf]
                  %619 = vst [vmem:[%s481 + $0x110] sm:$0xf] %v618
                  %v620 = vld [vmem:[%s480 + $0x414] sm:$0xf]
                  %621 = vst [vmem:[%s481 + $0x114] sm:$0xf] %v620
                  %v622 = vld [vmem:[%s480 + $0x418] sm:$0xf]
                  %623 = vst [vmem:[%s481 + $0x118] sm:$0xf] %v622
                  %v624 = vld [vmem:[%s480 + $0x41c] sm:$0xf]
                  %625 = vst [vmem:[%s481 + $0x11c] sm:$0xf] %v624
                  %v626 = vld [vmem:[%s480 + $0x420] sm:$0xf]
                  %627 = vst [vmem:[%s481 + $0x120] sm:$0xf] %v626
                  %v628 = vld [vmem:[%s480 + $0x424] sm:$0xf]
                  %629 = vst [vmem:[%s481 + $0x124] sm:$0xf] %v628
                  %v630 = vld [vmem:[%s480 + $0x428] sm:$0xf]
                  %631 = vst [vmem:[%s481 + $0x128] sm:$0xf] %v630
                  %v632 = vld [vmem:[%s480 + $0x42c] sm:$0xf]
                  %633 = vst [vmem:[%s481 + $0x12c] sm:$0xf] %v632
                  %v634 = vld [vmem:[%s480 + $0x430] sm:$0xf]
                  %635 = vst [vmem:[%s481 + $0x130] sm:$0xf] %v634
                  %v636 = vld [vmem:[%s480 + $0x434] sm:$0xf]
                  %637 = vst [vmem:[%s481 + $0x134] sm:$0xf] %v636
                  %v638 = vld [vmem:[%s480 + $0x438] sm:$0xf]
                  %639 = vst [vmem:[%s481 + $0x138] sm:$0xf] %v638
                  %v640 = vld [vmem:[%s480 + $0x43c] sm:$0xf]
                  %641 = vst [vmem:[%s481 + $0x13c] sm:$0xf] %v640
                  %v642 = vld [vmem:[%s480 + $0x440] sm:$0xf]
                  %643 = vst [vmem:[%s481 + $0x140] sm:$0xf] %v642
                  %v644 = vld [vmem:[%s480 + $0x444] sm:$0xf]
                  %645 = vst [vmem:[%s481 + $0x144] sm:$0xf] %v644
                  %v646 = vld [vmem:[%s480 + $0x448] sm:$0xf]
                  %647 = vst [vmem:[%s481 + $0x148] sm:$0xf] %v646
                  %v648 = vld [vmem:[%s480 + $0x44c] sm:$0xf]
                  %649 = vst [vmem:[%s481 + $0x14c] sm:$0xf] %v648
                  %v650 = vld [vmem:[%s480 + $0x450] sm:$0xf]
                  %651 = vst [vmem:[%s481 + $0x150] sm:$0xf] %v650
                  %v652 = vld [vmem:[%s480 + $0x454] sm:$0xf]
                  %653 = vst [vmem:[%s481 + $0x154] sm:$0xf] %v652
                  %v654 = vld [vmem:[%s480 + $0x458] sm:$0xf]
                  %655 = vst [vmem:[%s481 + $0x158] sm:$0xf] %v654
                  %v656 = vld [vmem:[%s480 + $0x45c] sm:$0xf]
                  %657 = vst [vmem:[%s481 + $0x15c] sm:$0xf] %v656
                  %v658 = vld [vmem:[%s480 + $0x460] sm:$0xf]
                  %659 = vst [vmem:[%s481 + $0x160] sm:$0xf] %v658
                  %v660 = vld [vmem:[%s480 + $0x464] sm:$0xf]
                  %661 = vst [vmem:[%s481 + $0x164] sm:$0xf] %v660
                  %v662 = vld [vmem:[%s480 + $0x468] sm:$0xf]
                  %663 = vst [vmem:[%s481 + $0x168] sm:$0xf] %v662
                  %v664 = vld [vmem:[%s480 + $0x46c] sm:$0xf]
                  %665 = vst [vmem:[%s481 + $0x16c] sm:$0xf] %v664
                  %v666 = vld [vmem:[%s480 + $0x470] sm:$0xf]
                  %667 = vst [vmem:[%s481 + $0x170] sm:$0xf] %v666
                  %v668 = vld [vmem:[%s480 + $0x474] sm:$0xf]
                  %669 = vst [vmem:[%s481 + $0x174] sm:$0xf] %v668
                  %v670 = vld [vmem:[%s480 + $0x478] sm:$0xf]
                  %671 = vst [vmem:[%s481 + $0x178] sm:$0xf] %v670
                  %v672 = vld [vmem:[%s480 + $0x47c] sm:$0xf]
                  %673 = vst [vmem:[%s481 + $0x17c] sm:$0xf] %v672
                  %v674 = vld [vmem:[%s480 + $0x480] sm:$0xf]
                  %675 = vst [vmem:[%s481 + $0x180] sm:$0xf] %v674
                  %v676 = vld [vmem:[%s480 + $0x484] sm:$0xf]
                  %677 = vst [vmem:[%s481 + $0x184] sm:$0xf] %v676
                  %v678 = vld [vmem:[%s480 + $0x488] sm:$0xf]
                  %679 = vst [vmem:[%s481 + $0x188] sm:$0xf] %v678
                  %v680 = vld [vmem:[%s480 + $0x48c] sm:$0xf]
                  %681 = vst [vmem:[%s481 + $0x18c] sm:$0xf] %v680
                  %v682 = vld [vmem:[%s480 + $0x490] sm:$0xf]
                  %683 = vst [vmem:[%s481 + $0x190] sm:$0xf] %v682
                  %v684 = vld [vmem:[%s480 + $0x494] sm:$0xf]
                  %685 = vst [vmem:[%s481 + $0x194] sm:$0xf] %v684
                  %v686 = vld [vmem:[%s480 + $0x498] sm:$0xf]
                  %687 = vst [vmem:[%s481 + $0x198] sm:$0xf] %v686
                  %v688 = vld [vmem:[%s480 + $0x49c] sm:$0xf]
                  %689 = vst [vmem:[%s481 + $0x19c] sm:$0xf] %v688
                  %v690 = vld [vmem:[%s480 + $0x4a0] sm:$0xf]
                  %691 = vst [vmem:[%s481 + $0x1a0] sm:$0xf] %v690
                  %v692 = vld [vmem:[%s480 + $0x4a4] sm:$0xf]
                  %693 = vst [vmem:[%s481 + $0x1a4] sm:$0xf] %v692
                  %v694 = vld [vmem:[%s480 + $0x4a8] sm:$0xf]
                  %695 = vst [vmem:[%s481 + $0x1a8] sm:$0xf] %v694
                  %v696 = vld [vmem:[%s480 + $0x4ac] sm:$0xf]
                  %697 = vst [vmem:[%s481 + $0x1ac] sm:$0xf] %v696
                  %v698 = vld [vmem:[%s480 + $0x4b0] sm:$0xf]
                  %699 = vst [vmem:[%s481 + $0x1b0] sm:$0xf] %v698
                  %v700 = vld [vmem:[%s480 + $0x4b4] sm:$0xf]
                  %701 = vst [vmem:[%s481 + $0x1b4] sm:$0xf] %v700
                  %v702 = vld [vmem:[%s480 + $0x4b8] sm:$0xf]
                  %703 = vst [vmem:[%s481 + $0x1b8] sm:$0xf] %v702
                  %v704 = vld [vmem:[%s480 + $0x4bc] sm:$0xf]
                  %705 = vst [vmem:[%s481 + $0x1bc] sm:$0xf] %v704
                  %v706 = vld [vmem:[%s480 + $0x4c0] sm:$0xf]
                  %707 = vst [vmem:[%s481 + $0x1c0] sm:$0xf] %v706
                  %v708 = vld [vmem:[%s480 + $0x4c4] sm:$0xf]
                  %709 = vst [vmem:[%s481 + $0x1c4] sm:$0xf] %v708
                  %v710 = vld [vmem:[%s480 + $0x4c8] sm:$0xf]
                  %711 = vst [vmem:[%s481 + $0x1c8] sm:$0xf] %v710
                  %v712 = vld [vmem:[%s480 + $0x4cc] sm:$0xf]
                  %713 = vst [vmem:[%s481 + $0x1cc] sm:$0xf] %v712
                  %v714 = vld [vmem:[%s480 + $0x4d0] sm:$0xf]
                  %715 = vst [vmem:[%s481 + $0x1d0] sm:$0xf] %v714
                  %v716 = vld [vmem:[%s480 + $0x4d4] sm:$0xf]
                  %717 = vst [vmem:[%s481 + $0x1d4] sm:$0xf] %v716
                  %v718 = vld [vmem:[%s480 + $0x4d8] sm:$0xf]
                  %719 = vst [vmem:[%s481 + $0x1d8] sm:$0xf] %v718
                  %v720 = vld [vmem:[%s480 + $0x4dc] sm:$0xf]
                  %721 = vst [vmem:[%s481 + $0x1dc] sm:$0xf] %v720
                  %v722 = vld [vmem:[%s480 + $0x4e0] sm:$0xf]
                  %723 = vst [vmem:[%s481 + $0x1e0] sm:$0xf] %v722
                  %v724 = vld [vmem:[%s480 + $0x4e4] sm:$0xf]
                  %725 = vst [vmem:[%s481 + $0x1e4] sm:$0xf] %v724
                  %v726 = vld [vmem:[%s480 + $0x4e8] sm:$0xf]
                  %727 = vst [vmem:[%s481 + $0x1e8] sm:$0xf] %v726
                  %v728 = vld [vmem:[%s480 + $0x4ec] sm:$0xf]
                  %729 = vst [vmem:[%s481 + $0x1ec] sm:$0xf] %v728
                  %v730 = vld [vmem:[%s480 + $0x4f0] sm:$0xf]
                  %731 = vst [vmem:[%s481 + $0x1f0] sm:$0xf] %v730
                  %v732 = vld [vmem:[%s480 + $0x4f4] sm:$0xf]
                  %733 = vst [vmem:[%s481 + $0x1f4] sm:$0xf] %v732
                  %v734 = vld [vmem:[%s480 + $0x4f8] sm:$0xf]
                  %735 = vst [vmem:[%s481 + $0x1f8] sm:$0xf] %v734
                  %v736 = vld [vmem:[%s480 + $0x4fc] sm:$0xf]
                  %737 = vst [vmem:[%s481 + $0x1fc] sm:$0xf] %v736
                $region63: #{tpu_custom_call.1} parent=50 // loop_footer
                  %s479 = sadd.s32 1, %s475
                $region64: #{tpu_custom_call.1} parent=50 // loop_footer_branch
                  %474 = sbr.rel target = $region60
                $region65: #{tpu_custom_call.1} parent=50 // loop_exit
                  _
              $region51: #{tpu_custom_call.1} parent=35 // pred_fallthru
                _
            $region36: #{tpu_custom_call.1} parent=31 // pred_fallthru
              _
            // Predicated region
            $region37: #{tpu_custom_call.1} parent=31 // pred_check
              _
            $region38: #{tpu_custom_call.1} parent=31 // pred_check_branch
              %197 = sbr.rel (0) target = $region40
            $region39: #{tpu_custom_call.1} parent=31 // pred_region
              loop: start=0, step=1, limit=1
              $region41: #{tpu_custom_call.1} parent=39 // loop_pre_header
                _
              $region42: #{tpu_custom_call.1} parent=39 // loop_header
                %s200 = sphi 0, %s204
                %p201 = scmp.ge.s32.totalorder %s200, 1
                %s205 = sphi %s191, %s191
                %s206 = sphi %s185, %s185
              $region43: #{tpu_custom_call.1} parent=39 // loop_header_branch
                %203 = sbr.rel (%p201) target = $region47
              $region44: #{tpu_custom_call.1} parent=39 // loop_body
                %v207 = vld [vmem:[%s205] sm:$0xf]
                %208 = vst [vmem:[%s206] sm:$0xf] %v207
                %v209 = vld [vmem:[%s205 + $0x4] sm:$0xf]
                %210 = vst [vmem:[%s206 + $0x4] sm:$0xf] %v209
                %v211 = vld [vmem:[%s205 + $0x8] sm:$0xf]
                %212 = vst [vmem:[%s206 + $0x8] sm:$0xf] %v211
                %v213 = vld [vmem:[%s205 + $0xc] sm:$0xf]
                %214 = vst [vmem:[%s206 + $0xc] sm:$0xf] %v213
                %v215 = vld [vmem:[%s205 + $0x10] sm:$0xf]
                %216 = vst [vmem:[%s206 + $0x10] sm:$0xf] %v215
                %v217 = vld [vmem:[%s205 + $0x14] sm:$0xf]
                %218 = vst [vmem:[%s206 + $0x14] sm:$0xf] %v217
                %v219 = vld [vmem:[%s205 + $0x18] sm:$0xf]
                %220 = vst [vmem:[%s206 + $0x18] sm:$0xf] %v219
                %v221 = vld [vmem:[%s205 + $0x1c] sm:$0xf]
                %222 = vst [vmem:[%s206 + $0x1c] sm:$0xf] %v221
                %v223 = vld [vmem:[%s205 + $0x20] sm:$0xf]
                %224 = vst [vmem:[%s206 + $0x20] sm:$0xf] %v223
                %v225 = vld [vmem:[%s205 + $0x24] sm:$0xf]
                %226 = vst [vmem:[%s206 + $0x24] sm:$0xf] %v225
                %v227 = vld [vmem:[%s205 + $0x28] sm:$0xf]
                %228 = vst [vmem:[%s206 + $0x28] sm:$0xf] %v227
                %v229 = vld [vmem:[%s205 + $0x2c] sm:$0xf]
                %230 = vst [vmem:[%s206 + $0x2c] sm:$0xf] %v229
                %v231 = vld [vmem:[%s205 + $0x30] sm:$0xf]
                %232 = vst [vmem:[%s206 + $0x30] sm:$0xf] %v231
                %v233 = vld [vmem:[%s205 + $0x34] sm:$0xf]
                %234 = vst [vmem:[%s206 + $0x34] sm:$0xf] %v233
                %v235 = vld [vmem:[%s205 + $0x38] sm:$0xf]
                %236 = vst [vmem:[%s206 + $0x38] sm:$0xf] %v235
                %v237 = vld [vmem:[%s205 + $0x3c] sm:$0xf]
                %238 = vst [vmem:[%s206 + $0x3c] sm:$0xf] %v237
                %v239 = vld [vmem:[%s205 + $0x40] sm:$0xf]
                %240 = vst [vmem:[%s206 + $0x40] sm:$0xf] %v239
                %v241 = vld [vmem:[%s205 + $0x44] sm:$0xf]
                %242 = vst [vmem:[%s206 + $0x44] sm:$0xf] %v241
                %v243 = vld [vmem:[%s205 + $0x48] sm:$0xf]
                %244 = vst [vmem:[%s206 + $0x48] sm:$0xf] %v243
                %v245 = vld [vmem:[%s205 + $0x4c] sm:$0xf]
                %246 = vst [vmem:[%s206 + $0x4c] sm:$0xf] %v245
                %v247 = vld [vmem:[%s205 + $0x50] sm:$0xf]
                %248 = vst [vmem:[%s206 + $0x50] sm:$0xf] %v247
                %v249 = vld [vmem:[%s205 + $0x54] sm:$0xf]
                %250 = vst [vmem:[%s206 + $0x54] sm:$0xf] %v249
                %v251 = vld [vmem:[%s205 + $0x58] sm:$0xf]
                %252 = vst [vmem:[%s206 + $0x58] sm:$0xf] %v251
                %v253 = vld [vmem:[%s205 + $0x5c] sm:$0xf]
                %254 = vst [vmem:[%s206 + $0x5c] sm:$0xf] %v253
                %v255 = vld [vmem:[%s205 + $0x60] sm:$0xf]
                %256 = vst [vmem:[%s206 + $0x60] sm:$0xf] %v255
                %v257 = vld [vmem:[%s205 + $0x64] sm:$0xf]
                %258 = vst [vmem:[%s206 + $0x64] sm:$0xf] %v257
                %v259 = vld [vmem:[%s205 + $0x68] sm:$0xf]
                %260 = vst [vmem:[%s206 + $0x68] sm:$0xf] %v259
                %v261 = vld [vmem:[%s205 + $0x6c] sm:$0xf]
                %262 = vst [vmem:[%s206 + $0x6c] sm:$0xf] %v261
                %v263 = vld [vmem:[%s205 + $0x70] sm:$0xf]
                %264 = vst [vmem:[%s206 + $0x70] sm:$0xf] %v263
                %v265 = vld [vmem:[%s205 + $0x74] sm:$0xf]
                %266 = vst [vmem:[%s206 + $0x74] sm:$0xf] %v265
                %v267 = vld [vmem:[%s205 + $0x78] sm:$0xf]
                %268 = vst [vmem:[%s206 + $0x78] sm:$0xf] %v267
                %v269 = vld [vmem:[%s205 + $0x7c] sm:$0xf]
                %270 = vst [vmem:[%s206 + $0x7c] sm:$0xf] %v269
                %v271 = vld [vmem:[%s205 + $0x80] sm:$0xf]
                %272 = vst [vmem:[%s206 + $0x80] sm:$0xf] %v271
                %v273 = vld [vmem:[%s205 + $0x84] sm:$0xf]
                %274 = vst [vmem:[%s206 + $0x84] sm:$0xf] %v273
                %v275 = vld [vmem:[%s205 + $0x88] sm:$0xf]
                %276 = vst [vmem:[%s206 + $0x88] sm:$0xf] %v275
                %v277 = vld [vmem:[%s205 + $0x8c] sm:$0xf]
                %278 = vst [vmem:[%s206 + $0x8c] sm:$0xf] %v277
                %v279 = vld [vmem:[%s205 + $0x90] sm:$0xf]
                %280 = vst [vmem:[%s206 + $0x90] sm:$0xf] %v279
                %v281 = vld [vmem:[%s205 + $0x94] sm:$0xf]
                %282 = vst [vmem:[%s206 + $0x94] sm:$0xf] %v281
                %v283 = vld [vmem:[%s205 + $0x98] sm:$0xf]
                %284 = vst [vmem:[%s206 + $0x98] sm:$0xf] %v283
                %v285 = vld [vmem:[%s205 + $0x9c] sm:$0xf]
                %286 = vst [vmem:[%s206 + $0x9c] sm:$0xf] %v285
                %v287 = vld [vmem:[%s205 + $0xa0] sm:$0xf]
                %288 = vst [vmem:[%s206 + $0xa0] sm:$0xf] %v287
                %v289 = vld [vmem:[%s205 + $0xa4] sm:$0xf]
                %290 = vst [vmem:[%s206 + $0xa4] sm:$0xf] %v289
                %v291 = vld [vmem:[%s205 + $0xa8] sm:$0xf]
                %292 = vst [vmem:[%s206 + $0xa8] sm:$0xf] %v291
                %v293 = vld [vmem:[%s205 + $0xac] sm:$0xf]
                %294 = vst [vmem:[%s206 + $0xac] sm:$0xf] %v293
                %v295 = vld [vmem:[%s205 + $0xb0] sm:$0xf]
                %296 = vst [vmem:[%s206 + $0xb0] sm:$0xf] %v295
                %v297 = vld [vmem:[%s205 + $0xb4] sm:$0xf]
                %298 = vst [vmem:[%s206 + $0xb4] sm:$0xf] %v297
                %v299 = vld [vmem:[%s205 + $0xb8] sm:$0xf]
                %300 = vst [vmem:[%s206 + $0xb8] sm:$0xf] %v299
                %v301 = vld [vmem:[%s205 + $0xbc] sm:$0xf]
                %302 = vst [vmem:[%s206 + $0xbc] sm:$0xf] %v301
                %v303 = vld [vmem:[%s205 + $0xc0] sm:$0xf]
                %304 = vst [vmem:[%s206 + $0xc0] sm:$0xf] %v303
                %v305 = vld [vmem:[%s205 + $0xc4] sm:$0xf]
                %306 = vst [vmem:[%s206 + $0xc4] sm:$0xf] %v305
                %v307 = vld [vmem:[%s205 + $0xc8] sm:$0xf]
                %308 = vst [vmem:[%s206 + $0xc8] sm:$0xf] %v307
                %v309 = vld [vmem:[%s205 + $0xcc] sm:$0xf]
                %310 = vst [vmem:[%s206 + $0xcc] sm:$0xf] %v309
                %v311 = vld [vmem:[%s205 + $0xd0] sm:$0xf]
                %312 = vst [vmem:[%s206 + $0xd0] sm:$0xf] %v311
                %v313 = vld [vmem:[%s205 + $0xd4] sm:$0xf]
                %314 = vst [vmem:[%s206 + $0xd4] sm:$0xf] %v313
                %v315 = vld [vmem:[%s205 + $0xd8] sm:$0xf]
                %316 = vst [vmem:[%s206 + $0xd8] sm:$0xf] %v315
                %v317 = vld [vmem:[%s205 + $0xdc] sm:$0xf]
                %318 = vst [vmem:[%s206 + $0xdc] sm:$0xf] %v317
                %v319 = vld [vmem:[%s205 + $0xe0] sm:$0xf]
                %320 = vst [vmem:[%s206 + $0xe0] sm:$0xf] %v319
                %v321 = vld [vmem:[%s205 + $0xe4] sm:$0xf]
                %322 = vst [vmem:[%s206 + $0xe4] sm:$0xf] %v321
                %v323 = vld [vmem:[%s205 + $0xe8] sm:$0xf]
                %324 = vst [vmem:[%s206 + $0xe8] sm:$0xf] %v323
                %v325 = vld [vmem:[%s205 + $0xec] sm:$0xf]
                %326 = vst [vmem:[%s206 + $0xec] sm:$0xf] %v325
                %v327 = vld [vmem:[%s205 + $0xf0] sm:$0xf]
                %328 = vst [vmem:[%s206 + $0xf0] sm:$0xf] %v327
                %v329 = vld [vmem:[%s205 + $0xf4] sm:$0xf]
                %330 = vst [vmem:[%s206 + $0xf4] sm:$0xf] %v329
                %v331 = vld [vmem:[%s205 + $0xf8] sm:$0xf]
                %332 = vst [vmem:[%s206 + $0xf8] sm:$0xf] %v331
                %v333 = vld [vmem:[%s205 + $0xfc] sm:$0xf]
                %334 = vst [vmem:[%s206 + $0xfc] sm:$0xf] %v333
                %v335 = vld [vmem:[%s205 + $0x400] sm:$0xf]
                %336 = vst [vmem:[%s206 + $0x100] sm:$0xf] %v335
                %v337 = vld [vmem:[%s205 + $0x404] sm:$0xf]
                %338 = vst [vmem:[%s206 + $0x104] sm:$0xf] %v337
                %v339 = vld [vmem:[%s205 + $0x408] sm:$0xf]
                %340 = vst [vmem:[%s206 + $0x108] sm:$0xf] %v339
                %v341 = vld [vmem:[%s205 + $0x40c] sm:$0xf]
                %342 = vst [vmem:[%s206 + $0x10c] sm:$0xf] %v341
                %v343 = vld [vmem:[%s205 + $0x410] sm:$0xf]
                %344 = vst [vmem:[%s206 + $0x110] sm:$0xf] %v343
                %v345 = vld [vmem:[%s205 + $0x414] sm:$0xf]
                %346 = vst [vmem:[%s206 + $0x114] sm:$0xf] %v345
                %v347 = vld [vmem:[%s205 + $0x418] sm:$0xf]
                %348 = vst [vmem:[%s206 + $0x118] sm:$0xf] %v347
                %v349 = vld [vmem:[%s205 + $0x41c] sm:$0xf]
                %350 = vst [vmem:[%s206 + $0x11c] sm:$0xf] %v349
                %v351 = vld [vmem:[%s205 + $0x420] sm:$0xf]
                %352 = vst [vmem:[%s206 + $0x120] sm:$0xf] %v351
                %v353 = vld [vmem:[%s205 + $0x424] sm:$0xf]
                %354 = vst [vmem:[%s206 + $0x124] sm:$0xf] %v353
                %v355 = vld [vmem:[%s205 + $0x428] sm:$0xf]
                %356 = vst [vmem:[%s206 + $0x128] sm:$0xf] %v355
                %v357 = vld [vmem:[%s205 + $0x42c] sm:$0xf]
                %358 = vst [vmem:[%s206 + $0x12c] sm:$0xf] %v357
                %v359 = vld [vmem:[%s205 + $0x430] sm:$0xf]
                %360 = vst [vmem:[%s206 + $0x130] sm:$0xf] %v359
                %v361 = vld [vmem:[%s205 + $0x434] sm:$0xf]
                %362 = vst [vmem:[%s206 + $0x134] sm:$0xf] %v361
                %v363 = vld [vmem:[%s205 + $0x438] sm:$0xf]
                %364 = vst [vmem:[%s206 + $0x138] sm:$0xf] %v363
                %v365 = vld [vmem:[%s205 + $0x43c] sm:$0xf]
                %366 = vst [vmem:[%s206 + $0x13c] sm:$0xf] %v365
                %v367 = vld [vmem:[%s205 + $0x440] sm:$0xf]
                %368 = vst [vmem:[%s206 + $0x140] sm:$0xf] %v367
                %v369 = vld [vmem:[%s205 + $0x444] sm:$0xf]
                %370 = vst [vmem:[%s206 + $0x144] sm:$0xf] %v369
                %v371 = vld [vmem:[%s205 + $0x448] sm:$0xf]
                %372 = vst [vmem:[%s206 + $0x148] sm:$0xf] %v371
                %v373 = vld [vmem:[%s205 + $0x44c] sm:$0xf]
                %374 = vst [vmem:[%s206 + $0x14c] sm:$0xf] %v373
                %v375 = vld [vmem:[%s205 + $0x450] sm:$0xf]
                %376 = vst [vmem:[%s206 + $0x150] sm:$0xf] %v375
                %v377 = vld [vmem:[%s205 + $0x454] sm:$0xf]
                %378 = vst [vmem:[%s206 + $0x154] sm:$0xf] %v377
                %v379 = vld [vmem:[%s205 + $0x458] sm:$0xf]
                %380 = vst [vmem:[%s206 + $0x158] sm:$0xf] %v379
                %v381 = vld [vmem:[%s205 + $0x45c] sm:$0xf]
                %382 = vst [vmem:[%s206 + $0x15c] sm:$0xf] %v381
                %v383 = vld [vmem:[%s205 + $0x460] sm:$0xf]
                %384 = vst [vmem:[%s206 + $0x160] sm:$0xf] %v383
                %v385 = vld [vmem:[%s205 + $0x464] sm:$0xf]
                %386 = vst [vmem:[%s206 + $0x164] sm:$0xf] %v385
                %v387 = vld [vmem:[%s205 + $0x468] sm:$0xf]
                %388 = vst [vmem:[%s206 + $0x168] sm:$0xf] %v387
                %v389 = vld [vmem:[%s205 + $0x46c] sm:$0xf]
                %390 = vst [vmem:[%s206 + $0x16c] sm:$0xf] %v389
                %v391 = vld [vmem:[%s205 + $0x470] sm:$0xf]
                %392 = vst [vmem:[%s206 + $0x170] sm:$0xf] %v391
                %v393 = vld [vmem:[%s205 + $0x474] sm:$0xf]
                %394 = vst [vmem:[%s206 + $0x174] sm:$0xf] %v393
                %v395 = vld [vmem:[%s205 + $0x478] sm:$0xf]
                %396 = vst [vmem:[%s206 + $0x178] sm:$0xf] %v395
                %v397 = vld [vmem:[%s205 + $0x47c] sm:$0xf]
                %398 = vst [vmem:[%s206 + $0x17c] sm:$0xf] %v397
                %v399 = vld [vmem:[%s205 + $0x480] sm:$0xf]
                %400 = vst [vmem:[%s206 + $0x180] sm:$0xf] %v399
                %v401 = vld [vmem:[%s205 + $0x484] sm:$0xf]
                %402 = vst [vmem:[%s206 + $0x184] sm:$0xf] %v401
                %v403 = vld [vmem:[%s205 + $0x488] sm:$0xf]
                %404 = vst [vmem:[%s206 + $0x188] sm:$0xf] %v403
                %v405 = vld [vmem:[%s205 + $0x48c] sm:$0xf]
                %406 = vst [vmem:[%s206 + $0x18c] sm:$0xf] %v405
                %v407 = vld [vmem:[%s205 + $0x490] sm:$0xf]
                %408 = vst [vmem:[%s206 + $0x190] sm:$0xf] %v407
                %v409 = vld [vmem:[%s205 + $0x494] sm:$0xf]
                %410 = vst [vmem:[%s206 + $0x194] sm:$0xf] %v409
                %v411 = vld [vmem:[%s205 + $0x498] sm:$0xf]
                %412 = vst [vmem:[%s206 + $0x198] sm:$0xf] %v411
                %v413 = vld [vmem:[%s205 + $0x49c] sm:$0xf]
                %414 = vst [vmem:[%s206 + $0x19c] sm:$0xf] %v413
                %v415 = vld [vmem:[%s205 + $0x4a0] sm:$0xf]
                %416 = vst [vmem:[%s206 + $0x1a0] sm:$0xf] %v415
                %v417 = vld [vmem:[%s205 + $0x4a4] sm:$0xf]
                %418 = vst [vmem:[%s206 + $0x1a4] sm:$0xf] %v417
                %v419 = vld [vmem:[%s205 + $0x4a8] sm:$0xf]
                %420 = vst [vmem:[%s206 + $0x1a8] sm:$0xf] %v419
                %v421 = vld [vmem:[%s205 + $0x4ac] sm:$0xf]
                %422 = vst [vmem:[%s206 + $0x1ac] sm:$0xf] %v421
                %v423 = vld [vmem:[%s205 + $0x4b0] sm:$0xf]
                %424 = vst [vmem:[%s206 + $0x1b0] sm:$0xf] %v423
                %v425 = vld [vmem:[%s205 + $0x4b4] sm:$0xf]
                %426 = vst [vmem:[%s206 + $0x1b4] sm:$0xf] %v425
                %v427 = vld [vmem:[%s205 + $0x4b8] sm:$0xf]
                %428 = vst [vmem:[%s206 + $0x1b8] sm:$0xf] %v427
                %v429 = vld [vmem:[%s205 + $0x4bc] sm:$0xf]
                %430 = vst [vmem:[%s206 + $0x1bc] sm:$0xf] %v429
                %v431 = vld [vmem:[%s205 + $0x4c0] sm:$0xf]
                %432 = vst [vmem:[%s206 + $0x1c0] sm:$0xf] %v431
                %v433 = vld [vmem:[%s205 + $0x4c4] sm:$0xf]
                %434 = vst [vmem:[%s206 + $0x1c4] sm:$0xf] %v433
                %v435 = vld [vmem:[%s205 + $0x4c8] sm:$0xf]
                %436 = vst [vmem:[%s206 + $0x1c8] sm:$0xf] %v435
                %v437 = vld [vmem:[%s205 + $0x4cc] sm:$0xf]
                %438 = vst [vmem:[%s206 + $0x1cc] sm:$0xf] %v437
                %v439 = vld [vmem:[%s205 + $0x4d0] sm:$0xf]
                %440 = vst [vmem:[%s206 + $0x1d0] sm:$0xf] %v439
                %v441 = vld [vmem:[%s205 + $0x4d4] sm:$0xf]
                %442 = vst [vmem:[%s206 + $0x1d4] sm:$0xf] %v441
                %v443 = vld [vmem:[%s205 + $0x4d8] sm:$0xf]
                %444 = vst [vmem:[%s206 + $0x1d8] sm:$0xf] %v443
                %v445 = vld [vmem:[%s205 + $0x4dc] sm:$0xf]
                %446 = vst [vmem:[%s206 + $0x1dc] sm:$0xf] %v445
                %v447 = vld [vmem:[%s205 + $0x4e0] sm:$0xf]
                %448 = vst [vmem:[%s206 + $0x1e0] sm:$0xf] %v447
                %v449 = vld [vmem:[%s205 + $0x4e4] sm:$0xf]
                %450 = vst [vmem:[%s206 + $0x1e4] sm:$0xf] %v449
                %v451 = vld [vmem:[%s205 + $0x4e8] sm:$0xf]
                %452 = vst [vmem:[%s206 + $0x1e8] sm:$0xf] %v451
                %v453 = vld [vmem:[%s205 + $0x4ec] sm:$0xf]
                %454 = vst [vmem:[%s206 + $0x1ec] sm:$0xf] %v453
                %v455 = vld [vmem:[%s205 + $0x4f0] sm:$0xf]
                %456 = vst [vmem:[%s206 + $0x1f0] sm:$0xf] %v455
                %v457 = vld [vmem:[%s205 + $0x4f4] sm:$0xf]
                %458 = vst [vmem:[%s206 + $0x1f4] sm:$0xf] %v457
                %v459 = vld [vmem:[%s205 + $0x4f8] sm:$0xf]
                %460 = vst [vmem:[%s206 + $0x1f8] sm:$0xf] %v459
                %v461 = vld [vmem:[%s205 + $0x4fc] sm:$0xf]
                %462 = vst [vmem:[%s206 + $0x1fc] sm:$0xf] %v461
              $region45: #{tpu_custom_call.1} parent=39 // loop_footer
                %s204 = sadd.s32 1, %s200
              $region46: #{tpu_custom_call.1} parent=39 // loop_footer_branch
                %199 = sbr.rel target = $region42
              $region47: #{tpu_custom_call.1} parent=39 // loop_exit
                _
            $region40: #{tpu_custom_call.1} parent=31 // pred_fallthru
              _
          $region32: #{tpu_custom_call.1} parent=27 // pred_fallthru
            _
          %738 = vnop
        $region28: #{tpu_custom_call.1} parent=23 // pred_fallthru
          _
        // Predicated region
        $region66: #{tpu_custom_call.1} parent=23 // pred_check
          %p739 = pneg %p71
        $region67: #{tpu_custom_call.1} parent=23 // pred_check_branch
          %741 = sbr.rel (%p739) target = $region69
        $region68: #{tpu_custom_call.1} parent=23 // pred_region
          %s742 = smul.u32 64, %s19
          %p743 = scmp.lt.s32.totalorder %s742, 255
          %s744 = scalar_select %p743, %s742, 255
          %s745 = smul.addr %s744, 4
          %s746 = scalar_lea.vmem %s1, %s745
          %s747 = smul.u32 64, %s19
        $region69: #{tpu_custom_call.1} parent=23 // pred_fallthru
          _
      $region24: #{tpu_custom_call.1} parent=5 // pred_fallthru
        _
      %p748 = scmp.le.s32.totalorder 1, %s11
      %p749 = scmp.lt.s32.totalorder %s11, 5
      %p750 = pnand %p748, %p749
      %p751 = pneg %p750
      // Predicated region
      $region70: #{tpu_custom_call.1} parent=5 // pred_check
        _
      $region71: #{tpu_custom_call.1} parent=5 // pred_check_branch
        %753 = sbr.rel (%p750) target = $region73
      $region72: #{tpu_custom_call.1} parent=5 // pred_region
        %s754 = ssub.s32 %s11, 1
        %s755 = sand.u32 %s38, 1
        %s756 = sand.u32 %s38, 1
        %s757 = smul.addr %s756, 512
        %s758 = scalar_lea.vmem [#allocation3], %s757
        // Predicated region
        $region74: #{tpu_custom_call.1} parent=72 // pred_check
          %p759 = pneg %p51
        $region75: #{tpu_custom_call.1} parent=72 // pred_check_branch
          %761 = sbr.rel (%p759) target = $region77
        $region76: #{tpu_custom_call.1} parent=72 // pred_region
          _
        $region77: #{tpu_custom_call.1} parent=72 // pred_fallthru
          _
        %s762 = sand.u32 %s38, 1
        %s763 = sand.u32 %s38, 1
        %s764 = smul.addr %s763, 512
        %s765 = scalar_lea.vmem [#allocation3], %s764
        %p766 = pneg %p51
        %p767 = pneg %p48
        %s768 = smul.u32 64, %s21
        %p769 = scmp.lt.s32.totalorder %s768, 255
        %s770 = scalar_select %p769, %s768, 255
        %s771 = smul.addr %s770, 4
        %s772 = scalar_lea.vmem %s1, %s771
        %p773 = pneg %p77
        %p774 = pneg %p74
        %p775 = pneg %p98
        %p776 = pneg %p95
        %p777 = scmp.lt.s32.totalorder %s20, 0
        %s778 = scalar_select %p777, %s20, 0
        %s779 = smul.addr %s778, 2
        %s780 = scalar_lea.vmem %s3, %s779
        %p781 = pneg %p124
        %p782 = pneg %p121
        %p783 = pneg %p150
        %p784 = pneg %p147
        %s785 = smul.u32 2, %s20
        %s786 = smul.u32 64, %s21
        %s787 = smul.u32 64, %s21
        %p788 = scmp.lt.s32.totalorder %s787, 255
        %s789 = scalar_select %p788, %s787, 255
        %s790 = smul.addr %s789, 4
        %s791 = scalar_lea.vmem %s1, %s790
        %s792 = smul.u32 64, %s21
        %p793 = scmp.lt.s32.totalorder %s20, 0
        %s794 = scalar_select %p793, %s20, 0
        %s795 = smul.addr %s794, 2
        %s796 = scalar_lea.vmem %s3, %s795
        %p798 = scmp.eq.s32.totalorder %s21, 0
        // Predicated region
        $region78: #{tpu_custom_call.1} parent=72 // pred_check
          %p799 = pneg %p798
        $region79: #{tpu_custom_call.1} parent=72 // pred_check_branch
          %801 = sbr.rel (%p799) target = $region81
        $region80: #{tpu_custom_call.1} parent=72 // pred_region
          %802 = vst [vmem:[#allocation2] sm:$0x3] 0.0
        $region81: #{tpu_custom_call.1} parent=72 // pred_fallthru
          _
        %v803 = vld [vmem:[%s758] sm:$0xf]
        %v804 = vld [vmem:[%s758 + $0x4] sm:$0xf]
        %v805 = vld [vmem:[%s758 + $0x8] sm:$0xf]
        %v806 = vld [vmem:[%s758 + $0xc] sm:$0xf]
        %v807 = vld [vmem:[%s758 + $0x10] sm:$0xf]
        %v808 = vld [vmem:[%s758 + $0x14] sm:$0xf]
        %v809 = vld [vmem:[%s758 + $0x18] sm:$0xf]
        %v810 = vld [vmem:[%s758 + $0x1c] sm:$0xf]
        %v811 = vld [vmem:[%s758 + $0x20] sm:$0xf]
        %v812 = vld [vmem:[%s758 + $0x24] sm:$0xf]
        %v813 = vld [vmem:[%s758 + $0x28] sm:$0xf]
        %v814 = vld [vmem:[%s758 + $0x2c] sm:$0xf]
        %v815 = vld [vmem:[%s758 + $0x30] sm:$0xf]
        %v816 = vld [vmem:[%s758 + $0x34] sm:$0xf]
        %v817 = vld [vmem:[%s758 + $0x38] sm:$0xf]
        %v818 = vld [vmem:[%s758 + $0x3c] sm:$0xf]
        %v819 = vld [vmem:[%s758 + $0x40] sm:$0xf]
        %v820 = vld [vmem:[%s758 + $0x44] sm:$0xf]
        %v821 = vld [vmem:[%s758 + $0x48] sm:$0xf]
        %v822 = vld [vmem:[%s758 + $0x4c] sm:$0xf]
        %v823 = vld [vmem:[%s758 + $0x50] sm:$0xf]
        %v824 = vld [vmem:[%s758 + $0x54] sm:$0xf]
        %v825 = vld [vmem:[%s758 + $0x58] sm:$0xf]
        %v826 = vld [vmem:[%s758 + $0x5c] sm:$0xf]
        %v827 = vld [vmem:[%s758 + $0x60] sm:$0xf]
        %v828 = vld [vmem:[%s758 + $0x64] sm:$0xf]
        %v829 = vld [vmem:[%s758 + $0x68] sm:$0xf]
        %v830 = vld [vmem:[%s758 + $0x6c] sm:$0xf]
        %v831 = vld [vmem:[%s758 + $0x70] sm:$0xf]
        %v832 = vld [vmem:[%s758 + $0x74] sm:$0xf]
        %v833 = vld [vmem:[%s758 + $0x78] sm:$0xf]
        %v834 = vld [vmem:[%s758 + $0x7c] sm:$0xf]
        %v835 = vld [vmem:[%s758 + $0x80] sm:$0xf]
        %v836 = vld [vmem:[%s758 + $0x84] sm:$0xf]
        %v837 = vld [vmem:[%s758 + $0x88] sm:$0xf]
        %v838 = vld [vmem:[%s758 + $0x8c] sm:$0xf]
        %v839 = vld [vmem:[%s758 + $0x90] sm:$0xf]
        %v840 = vld [vmem:[%s758 + $0x94] sm:$0xf]
        %v841 = vld [vmem:[%s758 + $0x98] sm:$0xf]
        %v842 = vld [vmem:[%s758 + $0x9c] sm:$0xf]
        %v843 = vld [vmem:[%s758 + $0xa0] sm:$0xf]
        %v844 = vld [vmem:[%s758 + $0xa4] sm:$0xf]
        %v845 = vld [vmem:[%s758 + $0xa8] sm:$0xf]
        %v846 = vld [vmem:[%s758 + $0xac] sm:$0xf]
        %v847 = vld [vmem:[%s758 + $0xb0] sm:$0xf]
        %v848 = vld [vmem:[%s758 + $0xb4] sm:$0xf]
        %v849 = vld [vmem:[%s758 + $0xb8] sm:$0xf]
        %v850 = vld [vmem:[%s758 + $0xbc] sm:$0xf]
        %v851 = vld [vmem:[%s758 + $0xc0] sm:$0xf]
        %v852 = vld [vmem:[%s758 + $0xc4] sm:$0xf]
        %v853 = vld [vmem:[%s758 + $0xc8] sm:$0xf]
        %v854 = vld [vmem:[%s758 + $0xcc] sm:$0xf]
        %v855 = vld [vmem:[%s758 + $0xd0] sm:$0xf]
        %v856 = vld [vmem:[%s758 + $0xd4] sm:$0xf]
        %v857 = vld [vmem:[%s758 + $0xd8] sm:$0xf]
        %v858 = vld [vmem:[%s758 + $0xdc] sm:$0xf]
        %v859 = vld [vmem:[%s758 + $0xe0] sm:$0xf]
        %v860 = vld [vmem:[%s758 + $0xe4] sm:$0xf]
        %v861 = vld [vmem:[%s758 + $0xe8] sm:$0xf]
        %v862 = vld [vmem:[%s758 + $0xec] sm:$0xf]
        %v863 = vld [vmem:[%s758 + $0xf0] sm:$0xf]
        %v864 = vld [vmem:[%s758 + $0xf4] sm:$0xf]
        %v865 = vld [vmem:[%s758 + $0xf8] sm:$0xf]
        %v866 = vld [vmem:[%s758 + $0xfc] sm:$0xf]
        %v867 = vld [vmem:[%s758 + $0x100] sm:$0xf]
        %v868 = vld [vmem:[%s758 + $0x104] sm:$0xf]
        %v869 = vld [vmem:[%s758 + $0x108] sm:$0xf]
        %v870 = vld [vmem:[%s758 + $0x10c] sm:$0xf]
        %v871 = vld [vmem:[%s758 + $0x110] sm:$0xf]
        %v872 = vld [vmem:[%s758 + $0x114] sm:$0xf]
        %v873 = vld [vmem:[%s758 + $0x118] sm:$0xf]
        %v874 = vld [vmem:[%s758 + $0x11c] sm:$0xf]
        %v875 = vld [vmem:[%s758 + $0x120] sm:$0xf]
        %v876 = vld [vmem:[%s758 + $0x124] sm:$0xf]
        %v877 = vld [vmem:[%s758 + $0x128] sm:$0xf]
        %v878 = vld [vmem:[%s758 + $0x12c] sm:$0xf]
        %v879 = vld [vmem:[%s758 + $0x130] sm:$0xf]
        %v880 = vld [vmem:[%s758 + $0x134] sm:$0xf]
        %v881 = vld [vmem:[%s758 + $0x138] sm:$0xf]
        %v882 = vld [vmem:[%s758 + $0x13c] sm:$0xf]
        %v883 = vld [vmem:[%s758 + $0x140] sm:$0xf]
        %v884 = vld [vmem:[%s758 + $0x144] sm:$0xf]
        %v885 = vld [vmem:[%s758 + $0x148] sm:$0xf]
        %v886 = vld [vmem:[%s758 + $0x14c] sm:$0xf]
        %v887 = vld [vmem:[%s758 + $0x150] sm:$0xf]
        %v888 = vld [vmem:[%s758 + $0x154] sm:$0xf]
        %v889 = vld [vmem:[%s758 + $0x158] sm:$0xf]
        %v890 = vld [vmem:[%s758 + $0x15c] sm:$0xf]
        %v891 = vld [vmem:[%s758 + $0x160] sm:$0xf]
        %v892 = vld [vmem:[%s758 + $0x164] sm:$0xf]
        %v893 = vld [vmem:[%s758 + $0x168] sm:$0xf]
        %v894 = vld [vmem:[%s758 + $0x16c] sm:$0xf]
        %v895 = vld [vmem:[%s758 + $0x170] sm:$0xf]
        %v896 = vld [vmem:[%s758 + $0x174] sm:$0xf]
        %v897 = vld [vmem:[%s758 + $0x178] sm:$0xf]
        %v898 = vld [vmem:[%s758 + $0x17c] sm:$0xf]
        %v899 = vld [vmem:[%s758 + $0x180] sm:$0xf]
        %v900 = vld [vmem:[%s758 + $0x184] sm:$0xf]
        %v901 = vld [vmem:[%s758 + $0x188] sm:$0xf]
        %v902 = vld [vmem:[%s758 + $0x18c] sm:$0xf]
        %v903 = vld [vmem:[%s758 + $0x190] sm:$0xf]
        %v904 = vld [vmem:[%s758 + $0x194] sm:$0xf]
        %v905 = vld [vmem:[%s758 + $0x198] sm:$0xf]
        %v906 = vld [vmem:[%s758 + $0x19c] sm:$0xf]
        %v907 = vld [vmem:[%s758 + $0x1a0] sm:$0xf]
        %v908 = vld [vmem:[%s758 + $0x1a4] sm:$0xf]
        %v909 = vld [vmem:[%s758 + $0x1a8] sm:$0xf]
        %v910 = vld [vmem:[%s758 + $0x1ac] sm:$0xf]
        %v911 = vld [vmem:[%s758 + $0x1b0] sm:$0xf]
        %v912 = vld [vmem:[%s758 + $0x1b4] sm:$0xf]
        %v913 = vld [vmem:[%s758 + $0x1b8] sm:$0xf]
        %v914 = vld [vmem:[%s758 + $0x1bc] sm:$0xf]
        %v915 = vld [vmem:[%s758 + $0x1c0] sm:$0xf]
        %v916 = vld [vmem:[%s758 + $0x1c4] sm:$0xf]
        %v917 = vld [vmem:[%s758 + $0x1c8] sm:$0xf]
        %v918 = vld [vmem:[%s758 + $0x1cc] sm:$0xf]
        %v919 = vld [vmem:[%s758 + $0x1d0] sm:$0xf]
        %v920 = vld [vmem:[%s758 + $0x1d4] sm:$0xf]
        %v921 = vld [vmem:[%s758 + $0x1d8] sm:$0xf]
        %v922 = vld [vmem:[%s758 + $0x1dc] sm:$0xf]
        %v923 = vld [vmem:[%s758 + $0x1e0] sm:$0xf]
        %v924 = vld [vmem:[%s758 + $0x1e4] sm:$0xf]
        %v925 = vld [vmem:[%s758 + $0x1e8] sm:$0xf]
        %v926 = vld [vmem:[%s758 + $0x1ec] sm:$0xf]
        %v927 = vld [vmem:[%s758 + $0x1f0] sm:$0xf]
        %v928 = vld [vmem:[%s758 + $0x1f4] sm:$0xf]
        %v929 = vld [vmem:[%s758 + $0x1f8] sm:$0xf]
        %v930 = vld [vmem:[%s758 + $0x1fc] sm:$0xf]
        %v931 = vunpack.c.l.bf16 %v803
        %v932 = vunpack.c.l.bf16 %v804
        %v933 = vunpack.c.l.bf16 %v805
        %v934 = vunpack.c.l.bf16 %v806
        %v935 = vunpack.c.l.bf16 %v807
        %v936 = vunpack.c.l.bf16 %v808
        %v937 = vunpack.c.l.bf16 %v809
        %v938 = vunpack.c.l.bf16 %v810
        %v939 = vunpack.c.l.bf16 %v811
        %v940 = vunpack.c.l.bf16 %v812
        %v941 = vunpack.c.l.bf16 %v813
        %v942 = vunpack.c.l.bf16 %v814
        %v943 = vunpack.c.l.bf16 %v815
        %v944 = vunpack.c.l.bf16 %v816
        %v945 = vunpack.c.l.bf16 %v817
        %v946 = vunpack.c.l.bf16 %v818
        %v947 = vunpack.c.l.bf16 %v819
        %v948 = vunpack.c.l.bf16 %v820
        %v949 = vunpack.c.l.bf16 %v821
        %v950 = vunpack.c.l.bf16 %v822
        %v951 = vunpack.c.l.bf16 %v823
        %v952 = vunpack.c.l.bf16 %v824
        %v953 = vunpack.c.l.bf16 %v825
        %v954 = vunpack.c.l.bf16 %v826
        %v955 = vunpack.c.l.bf16 %v827
        %v956 = vunpack.c.l.bf16 %v828
        %v957 = vunpack.c.l.bf16 %v829
        %v958 = vunpack.c.l.bf16 %v830
        %v959 = vunpack.c.l.bf16 %v831
        %v960 = vunpack.c.l.bf16 %v832
        %v961 = vunpack.c.l.bf16 %v833
        %v962 = vunpack.c.l.bf16 %v834
        %v963 = vunpack.c.l.bf16 %v835
        %v964 = vunpack.c.l.bf16 %v836
        %v965 = vunpack.c.l.bf16 %v837
        %v966 = vunpack.c.l.bf16 %v838
        %v967 = vunpack.c.l.bf16 %v839
        %v968 = vunpack.c.l.bf16 %v840
        %v969 = vunpack.c.l.bf16 %v841
        %v970 = vunpack.c.l.bf16 %v842
        %v971 = vunpack.c.l.bf16 %v843
        %v972 = vunpack.c.l.bf16 %v844
        %v973 = vunpack.c.l.bf16 %v845
        %v974 = vunpack.c.l.bf16 %v846
        %v975 = vunpack.c.l.bf16 %v847
        %v976 = vunpack.c.l.bf16 %v848
        %v977 = vunpack.c.l.bf16 %v849
        %v978 = vunpack.c.l.bf16 %v850
        %v979 = vunpack.c.l.bf16 %v851
        %v980 = vunpack.c.l.bf16 %v852
        %v981 = vunpack.c.l.bf16 %v853
        %v982 = vunpack.c.l.bf16 %v854
        %v983 = vunpack.c.l.bf16 %v855
        %v984 = vunpack.c.l.bf16 %v856
        %v985 = vunpack.c.l.bf16 %v857
        %v986 = vunpack.c.l.bf16 %v858
        %v987 = vunpack.c.l.bf16 %v859
        %v988 = vunpack.c.l.bf16 %v860
        %v989 = vunpack.c.l.bf16 %v861
        %v990 = vunpack.c.l.bf16 %v862
        %v991 = vunpack.c.l.bf16 %v863
        %v992 = vunpack.c.l.bf16 %v864
        %v993 = vunpack.c.l.bf16 %v865
        %v994 = vunpack.c.l.bf16 %v866
        %v995 = vunpack.c.l.bf16 %v867
        %v996 = vunpack.c.l.bf16 %v868
        %v997 = vunpack.c.l.bf16 %v869
        %v998 = vunpack.c.l.bf16 %v870
        %v999 = vunpack.c.l.bf16 %v871
        %v1000 = vunpack.c.l.bf16 %v872
        %v1001 = vunpack.c.l.bf16 %v873
        %v1002 = vunpack.c.l.bf16 %v874
        %v1003 = vunpack.c.l.bf16 %v875
        %v1004 = vunpack.c.l.bf16 %v876
        %v1005 = vunpack.c.l.bf16 %v877
        %v1006 = vunpack.c.l.bf16 %v878
        %v1007 = vunpack.c.l.bf16 %v879
        %v1008 = vunpack.c.l.bf16 %v880
        %v1009 = vunpack.c.l.bf16 %v881
        %v1010 = vunpack.c.l.bf16 %v882
        %v1011 = vunpack.c.l.bf16 %v883
        %v1012 = vunpack.c.l.bf16 %v884
        %v1013 = vunpack.c.l.bf16 %v885
        %v1014 = vunpack.c.l.bf16 %v886
        %v1015 = vunpack.c.l.bf16 %v887
        %v1016 = vunpack.c.l.bf16 %v888
        %v1017 = vunpack.c.l.bf16 %v889
        %v1018 = vunpack.c.l.bf16 %v890
        %v1019 = vunpack.c.l.bf16 %v891
        %v1020 = vunpack.c.l.bf16 %v892
        %v1021 = vunpack.c.l.bf16 %v893
        %v1022 = vunpack.c.l.bf16 %v894
        %v1023 = vunpack.c.l.bf16 %v895
        %v1024 = vunpack.c.l.bf16 %v896
        %v1025 = vunpack.c.l.bf16 %v897
        %v1026 = vunpack.c.l.bf16 %v898
        %v1027 = vunpack.c.l.bf16 %v899
        %v1028 = vunpack.c.l.bf16 %v900
        %v1029 = vunpack.c.l.bf16 %v901
        %v1030 = vunpack.c.l.bf16 %v902
        %v1031 = vunpack.c.l.bf16 %v903
        %v1032 = vunpack.c.l.bf16 %v904
        %v1033 = vunpack.c.l.bf16 %v905
        %v1034 = vunpack.c.l.bf16 %v906
        %v1035 = vunpack.c.l.bf16 %v907
        %v1036 = vunpack.c.l.bf16 %v908
        %v1037 = vunpack.c.l.bf16 %v909
        %v1038 = vunpack.c.l.bf16 %v910
        %v1039 = vunpack.c.l.bf16 %v911
        %v1040 = vunpack.c.l.bf16 %v912
        %v1041 = vunpack.c.l.bf16 %v913
        %v1042 = vunpack.c.l.bf16 %v914
        %v1043 = vunpack.c.l.bf16 %v915
        %v1044 = vunpack.c.l.bf16 %v916
        %v1045 = vunpack.c.l.bf16 %v917
        %v1046 = vunpack.c.l.bf16 %v918
        %v1047 = vunpack.c.l.bf16 %v919
        %v1048 = vunpack.c.l.bf16 %v920
        %v1049 = vunpack.c.l.bf16 %v921
        %v1050 = vunpack.c.l.bf16 %v922
        %v1051 = vunpack.c.l.bf16 %v923
        %v1052 = vunpack.c.l.bf16 %v924
        %v1053 = vunpack.c.l.bf16 %v925
        %v1054 = vunpack.c.l.bf16 %v926
        %v1055 = vunpack.c.l.bf16 %v927
        %v1056 = vunpack.c.l.bf16 %v928
        %v1057 = vunpack.c.l.bf16 %v929
        %v1058 = vunpack.c.l.bf16 %v930
        %vm1059 = vcmask 523264
        %v1060 = vsel %vm1059, %v931, 0.0
        %1061 = vadd.xlane.f32.xlu0 %v1060
        %v1062 = vpop.xlane.xlu0 %1061
        %v1063 = vsel %vm1059, %v932, 0.0
        %1064 = vadd.xlane.f32.xlu0 %v1063
        %v1065 = vpop.xlane.xlu0 %1064
        %v1066 = vsel %vm1059, %v933, 0.0
        %1067 = vadd.xlane.f32.xlu0 %v1066
        %v1068 = vpop.xlane.xlu0 %1067
        %v1069 = vsel %vm1059, %v934, 0.0
        %1070 = vadd.xlane.f32.xlu0 %v1069
        %v1071 = vpop.xlane.xlu0 %1070
        %v1072 = vsel %vm1059, %v935, 0.0
        %1073 = vadd.xlane.f32.xlu0 %v1072
        %v1074 = vpop.xlane.xlu0 %1073
        %v1075 = vsel %vm1059, %v936, 0.0
        %1076 = vadd.xlane.f32.xlu0 %v1075
        %v1077 = vpop.xlane.xlu0 %1076
        %v1078 = vsel %vm1059, %v937, 0.0
        %1079 = vadd.xlane.f32.xlu0 %v1078
        %v1080 = vpop.xlane.xlu0 %1079
        %v1081 = vsel %vm1059, %v938, 0.0
        %1082 = vadd.xlane.f32.xlu0 %v1081
        %v1083 = vpop.xlane.xlu0 %1082
        %v1084 = vsel %vm1059, %v939, 0.0
        %1085 = vadd.xlane.f32.xlu0 %v1084
        %v1086 = vpop.xlane.xlu0 %1085
        %v1087 = vsel %vm1059, %v940, 0.0
        %1088 = vadd.xlane.f32.xlu0 %v1087
        %v1089 = vpop.xlane.xlu0 %1088
        %v1090 = vsel %vm1059, %v941, 0.0
        %1091 = vadd.xlane.f32.xlu0 %v1090
        %v1092 = vpop.xlane.xlu0 %1091
        %v1093 = vsel %vm1059, %v942, 0.0
        %1094 = vadd.xlane.f32.xlu0 %v1093
        %v1095 = vpop.xlane.xlu0 %1094
        %v1096 = vsel %vm1059, %v943, 0.0
        %1097 = vadd.xlane.f32.xlu0 %v1096
        %v1098 = vpop.xlane.xlu0 %1097
        %v1099 = vsel %vm1059, %v944, 0.0
        %1100 = vadd.xlane.f32.xlu0 %v1099
        %v1101 = vpop.xlane.xlu0 %1100
        %v1102 = vsel %vm1059, %v945, 0.0
        %1103 = vadd.xlane.f32.xlu0 %v1102
        %v1104 = vpop.xlane.xlu0 %1103
        %v1105 = vsel %vm1059, %v946, 0.0
        %1106 = vadd.xlane.f32.xlu0 %v1105
        %v1107 = vpop.xlane.xlu0 %1106
        %v1108 = vsel %vm1059, %v947, 0.0
        %1109 = vadd.xlane.f32.xlu0 %v1108
        %v1110 = vpop.xlane.xlu0 %1109
        %v1111 = vsel %vm1059, %v948, 0.0
        %1112 = vadd.xlane.f32.xlu0 %v1111
        %v1113 = vpop.xlane.xlu0 %1112
        %v1114 = vsel %vm1059, %v949, 0.0
        %1115 = vadd.xlane.f32.xlu0 %v1114
        %v1116 = vpop.xlane.xlu0 %1115
        %v1117 = vsel %vm1059, %v950, 0.0
        %1118 = vadd.xlane.f32.xlu0 %v1117
        %v1119 = vpop.xlane.xlu0 %1118
        %v1120 = vsel %vm1059, %v951, 0.0
        %1121 = vadd.xlane.f32.xlu0 %v1120
        %v1122 = vpop.xlane.xlu0 %1121
        %v1123 = vsel %vm1059, %v952, 0.0
        %1124 = vadd.xlane.f32.xlu0 %v1123
        %v1125 = vpop.xlane.xlu0 %1124
        %v1126 = vsel %vm1059, %v953, 0.0
        %1127 = vadd.xlane.f32.xlu0 %v1126
        %v1128 = vpop.xlane.xlu0 %1127
        %v1129 = vsel %vm1059, %v954, 0.0
        %1130 = vadd.xlane.f32.xlu0 %v1129
        %v1131 = vpop.xlane.xlu0 %1130
        %v1132 = vsel %vm1059, %v955, 0.0
        %1133 = vadd.xlane.f32.xlu0 %v1132
        %v1134 = vpop.xlane.xlu0 %1133
        %v1135 = vsel %vm1059, %v956, 0.0
        %1136 = vadd.xlane.f32.xlu0 %v1135
        %v1137 = vpop.xlane.xlu0 %1136
        %v1138 = vsel %vm1059, %v957, 0.0
        %1139 = vadd.xlane.f32.xlu0 %v1138
        %v1140 = vpop.xlane.xlu0 %1139
        %v1141 = vsel %vm1059, %v958, 0.0
        %1142 = vadd.xlane.f32.xlu0 %v1141
        %v1143 = vpop.xlane.xlu0 %1142
        %v1144 = vsel %vm1059, %v959, 0.0
        %1145 = vadd.xlane.f32.xlu0 %v1144
        %v1146 = vpop.xlane.xlu0 %1145
        %v1147 = vsel %vm1059, %v960, 0.0
        %1148 = vadd.xlane.f32.xlu0 %v1147
        %v1149 = vpop.xlane.xlu0 %1148
        %v1150 = vsel %vm1059, %v961, 0.0
        %1151 = vadd.xlane.f32.xlu0 %v1150
        %v1152 = vpop.xlane.xlu0 %1151
        %v1153 = vsel %vm1059, %v962, 0.0
        %1154 = vadd.xlane.f32.xlu0 %v1153
        %v1155 = vpop.xlane.xlu0 %1154
        %v1156 = vsel %vm1059, %v963, 0.0
        %1157 = vadd.xlane.f32.xlu0 %v1156
        %v1158 = vpop.xlane.xlu0 %1157
        %v1159 = vsel %vm1059, %v964, 0.0
        %1160 = vadd.xlane.f32.xlu0 %v1159
        %v1161 = vpop.xlane.xlu0 %1160
        %v1162 = vsel %vm1059, %v965, 0.0
        %1163 = vadd.xlane.f32.xlu0 %v1162
        %v1164 = vpop.xlane.xlu0 %1163
        %v1165 = vsel %vm1059, %v966, 0.0
        %1166 = vadd.xlane.f32.xlu0 %v1165
        %v1167 = vpop.xlane.xlu0 %1166
        %v1168 = vsel %vm1059, %v967, 0.0
        %1169 = vadd.xlane.f32.xlu0 %v1168
        %v1170 = vpop.xlane.xlu0 %1169
        %v1171 = vsel %vm1059, %v968, 0.0
        %1172 = vadd.xlane.f32.xlu0 %v1171
        %v1173 = vpop.xlane.xlu0 %1172
        %v1174 = vsel %vm1059, %v969, 0.0
        %1175 = vadd.xlane.f32.xlu0 %v1174
        %v1176 = vpop.xlane.xlu0 %1175
        %v1177 = vsel %vm1059, %v970, 0.0
        %1178 = vadd.xlane.f32.xlu0 %v1177
        %v1179 = vpop.xlane.xlu0 %1178
        %v1180 = vsel %vm1059, %v971, 0.0
        %1181 = vadd.xlane.f32.xlu0 %v1180
        %v1182 = vpop.xlane.xlu0 %1181
        %v1183 = vsel %vm1059, %v972, 0.0
        %1184 = vadd.xlane.f32.xlu0 %v1183
        %v1185 = vpop.xlane.xlu0 %1184
        %v1186 = vsel %vm1059, %v973, 0.0
        %1187 = vadd.xlane.f32.xlu0 %v1186
        %v1188 = vpop.xlane.xlu0 %1187
        %v1189 = vsel %vm1059, %v974, 0.0
        %1190 = vadd.xlane.f32.xlu0 %v1189
        %v1191 = vpop.xlane.xlu0 %1190
        %v1192 = vsel %vm1059, %v975, 0.0
        %1193 = vadd.xlane.f32.xlu0 %v1192
        %v1194 = vpop.xlane.xlu0 %1193
        %v1195 = vsel %vm1059, %v976, 0.0
        %1196 = vadd.xlane.f32.xlu0 %v1195
        %v1197 = vpop.xlane.xlu0 %1196
        %v1198 = vsel %vm1059, %v977, 0.0
        %1199 = vadd.xlane.f32.xlu0 %v1198
        %v1200 = vpop.xlane.xlu0 %1199
        %v1201 = vsel %vm1059, %v978, 0.0
        %1202 = vadd.xlane.f32.xlu0 %v1201
        %v1203 = vpop.xlane.xlu0 %1202
        %v1204 = vsel %vm1059, %v979, 0.0
        %1205 = vadd.xlane.f32.xlu0 %v1204
        %v1206 = vpop.xlane.xlu0 %1205
        %v1207 = vsel %vm1059, %v980, 0.0
        %1208 = vadd.xlane.f32.xlu0 %v1207
        %v1209 = vpop.xlane.xlu0 %1208
        %v1210 = vsel %vm1059, %v981, 0.0
        %1211 = vadd.xlane.f32.xlu0 %v1210
        %v1212 = vpop.xlane.xlu0 %1211
        %v1213 = vsel %vm1059, %v982, 0.0
        %1214 = vadd.xlane.f32.xlu0 %v1213
        %v1215 = vpop.xlane.xlu0 %1214
        %v1216 = vsel %vm1059, %v983, 0.0
        %1217 = vadd.xlane.f32.xlu0 %v1216
        %v1218 = vpop.xlane.xlu0 %1217
        %v1219 = vsel %vm1059, %v984, 0.0
        %1220 = vadd.xlane.f32.xlu0 %v1219
        %v1221 = vpop.xlane.xlu0 %1220
        %v1222 = vsel %vm1059, %v985, 0.0
        %1223 = vadd.xlane.f32.xlu0 %v1222
        %v1224 = vpop.xlane.xlu0 %1223
        %v1225 = vsel %vm1059, %v986, 0.0
        %1226 = vadd.xlane.f32.xlu0 %v1225
        %v1227 = vpop.xlane.xlu0 %1226
        %v1228 = vsel %vm1059, %v987, 0.0
        %1229 = vadd.xlane.f32.xlu0 %v1228
        %v1230 = vpop.xlane.xlu0 %1229
        %v1231 = vsel %vm1059, %v988, 0.0
        %1232 = vadd.xlane.f32.xlu0 %v1231
        %v1233 = vpop.xlane.xlu0 %1232
        %v1234 = vsel %vm1059, %v989, 0.0
        %1235 = vadd.xlane.f32.xlu0 %v1234
        %v1236 = vpop.xlane.xlu0 %1235
        %v1237 = vsel %vm1059, %v990, 0.0
        %1238 = vadd.xlane.f32.xlu0 %v1237
        %v1239 = vpop.xlane.xlu0 %1238
        %v1240 = vsel %vm1059, %v991, 0.0
        %1241 = vadd.xlane.f32.xlu0 %v1240
        %v1242 = vpop.xlane.xlu0 %1241
        %v1243 = vsel %vm1059, %v992, 0.0
        %1244 = vadd.xlane.f32.xlu0 %v1243
        %v1245 = vpop.xlane.xlu0 %1244
        %v1246 = vsel %vm1059, %v993, 0.0
        %1247 = vadd.xlane.f32.xlu0 %v1246
        %v1248 = vpop.xlane.xlu0 %1247
        %v1249 = vsel %vm1059, %v994, 0.0
        %1250 = vadd.xlane.f32.xlu0 %v1249
        %v1251 = vpop.xlane.xlu0 %1250
        %v1252 = vsel %vm1059, %v995, 0.0
        %1253 = vadd.xlane.f32.xlu0 %v1252
        %v1254 = vpop.xlane.xlu0 %1253
        %v1255 = vsel %vm1059, %v996, 0.0
        %1256 = vadd.xlane.f32.xlu0 %v1255
        %v1257 = vpop.xlane.xlu0 %1256
        %v1258 = vsel %vm1059, %v997, 0.0
        %1259 = vadd.xlane.f32.xlu0 %v1258
        %v1260 = vpop.xlane.xlu0 %1259
        %v1261 = vsel %vm1059, %v998, 0.0
        %1262 = vadd.xlane.f32.xlu0 %v1261
        %v1263 = vpop.xlane.xlu0 %1262
        %v1264 = vsel %vm1059, %v999, 0.0
        %1265 = vadd.xlane.f32.xlu0 %v1264
        %v1266 = vpop.xlane.xlu0 %1265
        %v1267 = vsel %vm1059, %v1000, 0.0
        %1268 = vadd.xlane.f32.xlu0 %v1267
        %v1269 = vpop.xlane.xlu0 %1268
        %v1270 = vsel %vm1059, %v1001, 0.0
        %1271 = vadd.xlane.f32.xlu0 %v1270
        %v1272 = vpop.xlane.xlu0 %1271
        %v1273 = vsel %vm1059, %v1002, 0.0
        %1274 = vadd.xlane.f32.xlu0 %v1273
        %v1275 = vpop.xlane.xlu0 %1274
        %v1276 = vsel %vm1059, %v1003, 0.0
        %1277 = vadd.xlane.f32.xlu0 %v1276
        %v1278 = vpop.xlane.xlu0 %1277
        %v1279 = vsel %vm1059, %v1004, 0.0
        %1280 = vadd.xlane.f32.xlu0 %v1279
        %v1281 = vpop.xlane.xlu0 %1280
        %v1282 = vsel %vm1059, %v1005, 0.0
        %1283 = vadd.xlane.f32.xlu0 %v1282
        %v1284 = vpop.xlane.xlu0 %1283
        %v1285 = vsel %vm1059, %v1006, 0.0
        %1286 = vadd.xlane.f32.xlu0 %v1285
        %v1287 = vpop.xlane.xlu0 %1286
        %v1288 = vsel %vm1059, %v1007, 0.0
        %1289 = vadd.xlane.f32.xlu0 %v1288
        %v1290 = vpop.xlane.xlu0 %1289
        %v1291 = vsel %vm1059, %v1008, 0.0
        %1292 = vadd.xlane.f32.xlu0 %v1291
        %v1293 = vpop.xlane.xlu0 %1292
        %v1294 = vsel %vm1059, %v1009, 0.0
        %1295 = vadd.xlane.f32.xlu0 %v1294
        %v1296 = vpop.xlane.xlu0 %1295
        %v1297 = vsel %vm1059, %v1010, 0.0
        %1298 = vadd.xlane.f32.xlu0 %v1297
        %v1299 = vpop.xlane.xlu0 %1298
        %v1300 = vsel %vm1059, %v1011, 0.0
        %1301 = vadd.xlane.f32.xlu0 %v1300
        %v1302 = vpop.xlane.xlu0 %1301
        %v1303 = vsel %vm1059, %v1012, 0.0
        %1304 = vadd.xlane.f32.xlu0 %v1303
        %v1305 = vpop.xlane.xlu0 %1304
        %v1306 = vsel %vm1059, %v1013, 0.0
        %1307 = vadd.xlane.f32.xlu0 %v1306
        %v1308 = vpop.xlane.xlu0 %1307
        %v1309 = vsel %vm1059, %v1014, 0.0
        %1310 = vadd.xlane.f32.xlu0 %v1309
        %v1311 = vpop.xlane.xlu0 %1310
        %v1312 = vsel %vm1059, %v1015, 0.0
        %1313 = vadd.xlane.f32.xlu0 %v1312
        %v1314 = vpop.xlane.xlu0 %1313
        %v1315 = vsel %vm1059, %v1016, 0.0
        %1316 = vadd.xlane.f32.xlu0 %v1315
        %v1317 = vpop.xlane.xlu0 %1316
        %v1318 = vsel %vm1059, %v1017, 0.0
        %1319 = vadd.xlane.f32.xlu0 %v1318
        %v1320 = vpop.xlane.xlu0 %1319
        %v1321 = vsel %vm1059, %v1018, 0.0
        %1322 = vadd.xlane.f32.xlu0 %v1321
        %v1323 = vpop.xlane.xlu0 %1322
        %v1324 = vsel %vm1059, %v1019, 0.0
        %1325 = vadd.xlane.f32.xlu0 %v1324
        %v1326 = vpop.xlane.xlu0 %1325
        %v1327 = vsel %vm1059, %v1020, 0.0
        %1328 = vadd.xlane.f32.xlu0 %v1327
        %v1329 = vpop.xlane.xlu0 %1328
        %v1330 = vsel %vm1059, %v1021, 0.0
        %1331 = vadd.xlane.f32.xlu0 %v1330
        %v1332 = vpop.xlane.xlu0 %1331
        %v1333 = vsel %vm1059, %v1022, 0.0
        %1334 = vadd.xlane.f32.xlu0 %v1333
        %v1335 = vpop.xlane.xlu0 %1334
        %v1336 = vsel %vm1059, %v1023, 0.0
        %1337 = vadd.xlane.f32.xlu0 %v1336
        %v1338 = vpop.xlane.xlu0 %1337
        %v1339 = vsel %vm1059, %v1024, 0.0
        %1340 = vadd.xlane.f32.xlu0 %v1339
        %v1341 = vpop.xlane.xlu0 %1340
        %v1342 = vsel %vm1059, %v1025, 0.0
        %1343 = vadd.xlane.f32.xlu0 %v1342
        %v1344 = vpop.xlane.xlu0 %1343
        %v1345 = vsel %vm1059, %v1026, 0.0
        %1346 = vadd.xlane.f32.xlu0 %v1345
        %v1347 = vpop.xlane.xlu0 %1346
        %v1348 = vsel %vm1059, %v1027, 0.0
        %1349 = vadd.xlane.f32.xlu0 %v1348
        %v1350 = vpop.xlane.xlu0 %1349
        %v1351 = vsel %vm1059, %v1028, 0.0
        %1352 = vadd.xlane.f32.xlu0 %v1351
        %v1353 = vpop.xlane.xlu0 %1352
        %v1354 = vsel %vm1059, %v1029, 0.0
        %1355 = vadd.xlane.f32.xlu0 %v1354
        %v1356 = vpop.xlane.xlu0 %1355
        %v1357 = vsel %vm1059, %v1030, 0.0
        %1358 = vadd.xlane.f32.xlu0 %v1357
        %v1359 = vpop.xlane.xlu0 %1358
        %v1360 = vsel %vm1059, %v1031, 0.0
        %1361 = vadd.xlane.f32.xlu0 %v1360
        %v1362 = vpop.xlane.xlu0 %1361
        %v1363 = vsel %vm1059, %v1032, 0.0
        %1364 = vadd.xlane.f32.xlu0 %v1363
        %v1365 = vpop.xlane.xlu0 %1364
        %v1366 = vsel %vm1059, %v1033, 0.0
        %1367 = vadd.xlane.f32.xlu0 %v1366
        %v1368 = vpop.xlane.xlu0 %1367
        %v1369 = vsel %vm1059, %v1034, 0.0
        %1370 = vadd.xlane.f32.xlu0 %v1369
        %v1371 = vpop.xlane.xlu0 %1370
        %v1372 = vsel %vm1059, %v1035, 0.0
        %1373 = vadd.xlane.f32.xlu0 %v1372
        %v1374 = vpop.xlane.xlu0 %1373
        %v1375 = vsel %vm1059, %v1036, 0.0
        %1376 = vadd.xlane.f32.xlu0 %v1375
        %v1377 = vpop.xlane.xlu0 %1376
        %v1378 = vsel %vm1059, %v1037, 0.0
        %1379 = vadd.xlane.f32.xlu0 %v1378
        %v1380 = vpop.xlane.xlu0 %1379
        %v1381 = vsel %vm1059, %v1038, 0.0
        %1382 = vadd.xlane.f32.xlu0 %v1381
        %v1383 = vpop.xlane.xlu0 %1382
        %v1384 = vsel %vm1059, %v1039, 0.0
        %1385 = vadd.xlane.f32.xlu0 %v1384
        %v1386 = vpop.xlane.xlu0 %1385
        %v1387 = vsel %vm1059, %v1040, 0.0
        %1388 = vadd.xlane.f32.xlu0 %v1387
        %v1389 = vpop.xlane.xlu0 %1388
        %v1390 = vsel %vm1059, %v1041, 0.0
        %1391 = vadd.xlane.f32.xlu0 %v1390
        %v1392 = vpop.xlane.xlu0 %1391
        %v1393 = vsel %vm1059, %v1042, 0.0
        %1394 = vadd.xlane.f32.xlu0 %v1393
        %v1395 = vpop.xlane.xlu0 %1394
        %v1396 = vsel %vm1059, %v1043, 0.0
        %1397 = vadd.xlane.f32.xlu0 %v1396
        %v1398 = vpop.xlane.xlu0 %1397
        %v1399 = vsel %vm1059, %v1044, 0.0
        %1400 = vadd.xlane.f32.xlu0 %v1399
        %v1401 = vpop.xlane.xlu0 %1400
        %v1402 = vsel %vm1059, %v1045, 0.0
        %1403 = vadd.xlane.f32.xlu0 %v1402
        %v1404 = vpop.xlane.xlu0 %1403
        %v1405 = vsel %vm1059, %v1046, 0.0
        %1406 = vadd.xlane.f32.xlu0 %v1405
        %v1407 = vpop.xlane.xlu0 %1406
        %v1408 = vsel %vm1059, %v1047, 0.0
        %1409 = vadd.xlane.f32.xlu0 %v1408
        %v1410 = vpop.xlane.xlu0 %1409
        %v1411 = vsel %vm1059, %v1048, 0.0
        %1412 = vadd.xlane.f32.xlu0 %v1411
        %v1413 = vpop.xlane.xlu0 %1412
        %v1414 = vsel %vm1059, %v1049, 0.0
        %1415 = vadd.xlane.f32.xlu0 %v1414
        %v1416 = vpop.xlane.xlu0 %1415
        %v1417 = vsel %vm1059, %v1050, 0.0
        %1418 = vadd.xlane.f32.xlu0 %v1417
        %v1419 = vpop.xlane.xlu0 %1418
        %v1420 = vsel %vm1059, %v1051, 0.0
        %1421 = vadd.xlane.f32.xlu0 %v1420
        %v1422 = vpop.xlane.xlu0 %1421
        %v1423 = vsel %vm1059, %v1052, 0.0
        %1424 = vadd.xlane.f32.xlu0 %v1423
        %v1425 = vpop.xlane.xlu0 %1424
        %v1426 = vsel %vm1059, %v1053, 0.0
        %1427 = vadd.xlane.f32.xlu0 %v1426
        %v1428 = vpop.xlane.xlu0 %1427
        %v1429 = vsel %vm1059, %v1054, 0.0
        %1430 = vadd.xlane.f32.xlu0 %v1429
        %v1431 = vpop.xlane.xlu0 %1430
        %v1432 = vsel %vm1059, %v1055, 0.0
        %1433 = vadd.xlane.f32.xlu0 %v1432
        %v1434 = vpop.xlane.xlu0 %1433
        %v1435 = vsel %vm1059, %v1056, 0.0
        %1436 = vadd.xlane.f32.xlu0 %v1435
        %v1437 = vpop.xlane.xlu0 %1436
        %v1438 = vsel %vm1059, %v1057, 0.0
        %1439 = vadd.xlane.f32.xlu0 %v1438
        %v1440 = vpop.xlane.xlu0 %1439
        %v1441 = vsel %vm1059, %v1058, 0.0
        %1442 = vadd.xlane.f32.xlu0 %v1441
        %v1443 = vpop.xlane.xlu0 %1442
        %v1444 = vrcp.pop 64.0
        %v1445 = vmul.f32 %v1062, %v1444
        %v1446 = vmul.f32 %v1065, %v1444
        %v1447 = vmul.f32 %v1068, %v1444
        %v1448 = vmul.f32 %v1071, %v1444
        %v1449 = vmul.f32 %v1074, %v1444
        %v1450 = vmul.f32 %v1077, %v1444
        %v1451 = vmul.f32 %v1080, %v1444
        %v1452 = vmul.f32 %v1083, %v1444
        %v1453 = vmul.f32 %v1086, %v1444
        %v1454 = vmul.f32 %v1089, %v1444
        %v1455 = vmul.f32 %v1092, %v1444
        %v1456 = vmul.f32 %v1095, %v1444
        %v1457 = vmul.f32 %v1098, %v1444
        %v1458 = vmul.f32 %v1101, %v1444
        %v1459 = vmul.f32 %v1104, %v1444
        %v1460 = vmul.f32 %v1107, %v1444
        %v1461 = vmul.f32 %v1110, %v1444
        %v1462 = vmul.f32 %v1113, %v1444
        %v1463 = vmul.f32 %v1116, %v1444
        %v1464 = vmul.f32 %v1119, %v1444
        %v1465 = vmul.f32 %v1122, %v1444
        %v1466 = vmul.f32 %v1125, %v1444
        %v1467 = vmul.f32 %v1128, %v1444
        %v1468 = vmul.f32 %v1131, %v1444
        %v1469 = vmul.f32 %v1134, %v1444
        %v1470 = vmul.f32 %v1137, %v1444
        %v1471 = vmul.f32 %v1140, %v1444
        %v1472 = vmul.f32 %v1143, %v1444
        %v1473 = vmul.f32 %v1146, %v1444
        %v1474 = vmul.f32 %v1149, %v1444
        %v1475 = vmul.f32 %v1152, %v1444
        %v1476 = vmul.f32 %v1155, %v1444
        %v1477 = vmul.f32 %v1158, %v1444
        %v1478 = vmul.f32 %v1161, %v1444
        %v1479 = vmul.f32 %v1164, %v1444
        %v1480 = vmul.f32 %v1167, %v1444
        %v1481 = vmul.f32 %v1170, %v1444
        %v1482 = vmul.f32 %v1173, %v1444
        %v1483 = vmul.f32 %v1176, %v1444
        %v1484 = vmul.f32 %v1179, %v1444
        %v1485 = vmul.f32 %v1182, %v1444
        %v1486 = vmul.f32 %v1185, %v1444
        %v1487 = vmul.f32 %v1188, %v1444
        %v1488 = vmul.f32 %v1191, %v1444
        %v1489 = vmul.f32 %v1194, %v1444
        %v1490 = vmul.f32 %v1197, %v1444
        %v1491 = vmul.f32 %v1200, %v1444
        %v1492 = vmul.f32 %v1203, %v1444
        %v1493 = vmul.f32 %v1206, %v1444
        %v1494 = vmul.f32 %v1209, %v1444
        %v1495 = vmul.f32 %v1212, %v1444
        %v1496 = vmul.f32 %v1215, %v1444
        %v1497 = vmul.f32 %v1218, %v1444
        %v1498 = vmul.f32 %v1221, %v1444
        %v1499 = vmul.f32 %v1224, %v1444
        %v1500 = vmul.f32 %v1227, %v1444
        %v1501 = vmul.f32 %v1230, %v1444
        %v1502 = vmul.f32 %v1233, %v1444
        %v1503 = vmul.f32 %v1236, %v1444
        %v1504 = vmul.f32 %v1239, %v1444
        %v1505 = vmul.f32 %v1242, %v1444
        %v1506 = vmul.f32 %v1245, %v1444
        %v1507 = vmul.f32 %v1248, %v1444
        %v1508 = vmul.f32 %v1251, %v1444
        %v1509 = vmul.f32 %v1254, %v1444
        %v1510 = vmul.f32 %v1257, %v1444
        %v1511 = vmul.f32 %v1260, %v1444
        %v1512 = vmul.f32 %v1263, %v1444
        %v1513 = vmul.f32 %v1266, %v1444
        %v1514 = vmul.f32 %v1269, %v1444
        %v1515 = vmul.f32 %v1272, %v1444
        %v1516 = vmul.f32 %v1275, %v1444
        %v1517 = vmul.f32 %v1278, %v1444
        %v1518 = vmul.f32 %v1281, %v1444
        %v1519 = vmul.f32 %v1284, %v1444
        %v1520 = vmul.f32 %v1287, %v1444
        %v1521 = vmul.f32 %v1290, %v1444
        %v1522 = vmul.f32 %v1293, %v1444
        %v1523 = vmul.f32 %v1296, %v1444
        %v1524 = vmul.f32 %v1299, %v1444
        %v1525 = vmul.f32 %v1302, %v1444
        %v1526 = vmul.f32 %v1305, %v1444
        %v1527 = vmul.f32 %v1308, %v1444
        %v1528 = vmul.f32 %v1311, %v1444
        %v1529 = vmul.f32 %v1314, %v1444
        %v1530 = vmul.f32 %v1317, %v1444
        %v1531 = vmul.f32 %v1320, %v1444
        %v1532 = vmul.f32 %v1323, %v1444
        %v1533 = vmul.f32 %v1326, %v1444
        %v1534 = vmul.f32 %v1329, %v1444
        %v1535 = vmul.f32 %v1332, %v1444
        %v1536 = vmul.f32 %v1335, %v1444
        %v1537 = vmul.f32 %v1338, %v1444
        %v1538 = vmul.f32 %v1341, %v1444
        %v1539 = vmul.f32 %v1344, %v1444
        %v1540 = vmul.f32 %v1347, %v1444
        %v1541 = vmul.f32 %v1350, %v1444
        %v1542 = vmul.f32 %v1353, %v1444
        %v1543 = vmul.f32 %v1356, %v1444
        %v1544 = vmul.f32 %v1359, %v1444
        %v1545 = vmul.f32 %v1362, %v1444
        %v1546 = vmul.f32 %v1365, %v1444
        %v1547 = vmul.f32 %v1368, %v1444
        %v1548 = vmul.f32 %v1371, %v1444
        %v1549 = vmul.f32 %v1374, %v1444
        %v1550 = vmul.f32 %v1377, %v1444
        %v1551 = vmul.f32 %v1380, %v1444
        %v1552 = vmul.f32 %v1383, %v1444
        %v1553 = vmul.f32 %v1386, %v1444
        %v1554 = vmul.f32 %v1389, %v1444
        %v1555 = vmul.f32 %v1392, %v1444
        %v1556 = vmul.f32 %v1395, %v1444
        %v1557 = vmul.f32 %v1398, %v1444
        %v1558 = vmul.f32 %v1401, %v1444
        %v1559 = vmul.f32 %v1404, %v1444
        %v1560 = vmul.f32 %v1407, %v1444
        %v1561 = vmul.f32 %v1410, %v1444
        %v1562 = vmul.f32 %v1413, %v1444
        %v1563 = vmul.f32 %v1416, %v1444
        %v1564 = vmul.f32 %v1419, %v1444
        %v1565 = vmul.f32 %v1422, %v1444
        %v1566 = vmul.f32 %v1425, %v1444
        %v1567 = vmul.f32 %v1428, %v1444
        %v1568 = vmul.f32 %v1431, %v1444
        %v1569 = vmul.f32 %v1434, %v1444
        %v1570 = vmul.f32 %v1437, %v1444
        %v1571 = vmul.f32 %v1440, %v1444
        %v1572 = vmul.f32 %v1443, %v1444
        %v1573 = vld [vmem:[#allocation2] sm:$0x3]
        %v1574 = vpack.c.bf16 %v1446, %v1445
        %v1575 = vpack.c.bf16 %v1448, %v1447
        %v1576 = vpack.c.bf16 %v1450, %v1449
        %v1577 = vpack.c.bf16 %v1452, %v1451
        %v1578 = vpack.c.bf16 %v1454, %v1453
        %v1579 = vpack.c.bf16 %v1456, %v1455
        %v1580 = vpack.c.bf16 %v1458, %v1457
        %v1581 = vpack.c.bf16 %v1460, %v1459
        %v1582 = vpack.c.bf16 %v1462, %v1461
        %v1583 = vpack.c.bf16 %v1464, %v1463
        %v1584 = vpack.c.bf16 %v1466, %v1465
        %v1585 = vpack.c.bf16 %v1468, %v1467
        %v1586 = vpack.c.bf16 %v1470, %v1469
        %v1587 = vpack.c.bf16 %v1472, %v1471
        %v1588 = vpack.c.bf16 %v1474, %v1473
        %v1589 = vpack.c.bf16 %v1476, %v1475
        %v1590 = vpack.c.bf16 %v1478, %v1477
        %v1591 = vpack.c.bf16 %v1480, %v1479
        %v1592 = vpack.c.bf16 %v1482, %v1481
        %v1593 = vpack.c.bf16 %v1484, %v1483
        %v1594 = vpack.c.bf16 %v1486, %v1485
        %v1595 = vpack.c.bf16 %v1488, %v1487
        %v1596 = vpack.c.bf16 %v1490, %v1489
        %v1597 = vpack.c.bf16 %v1492, %v1491
        %v1598 = vpack.c.bf16 %v1494, %v1493
        %v1599 = vpack.c.bf16 %v1496, %v1495
        %v1600 = vpack.c.bf16 %v1498, %v1497
        %v1601 = vpack.c.bf16 %v1500, %v1499
        %v1602 = vpack.c.bf16 %v1502, %v1501
        %v1603 = vpack.c.bf16 %v1504, %v1503
        %v1604 = vpack.c.bf16 %v1506, %v1505
        %v1605 = vpack.c.bf16 %v1508, %v1507
        %v1606 = vpack.c.bf16 %v1510, %v1509
        %v1607 = vpack.c.bf16 %v1512, %v1511
        %v1608 = vpack.c.bf16 %v1514, %v1513
        %v1609 = vpack.c.bf16 %v1516, %v1515
        %v1610 = vpack.c.bf16 %v1518, %v1517
        %v1611 = vpack.c.bf16 %v1520, %v1519
        %v1612 = vpack.c.bf16 %v1522, %v1521
        %v1613 = vpack.c.bf16 %v1524, %v1523
        %v1614 = vpack.c.bf16 %v1526, %v1525
        %v1615 = vpack.c.bf16 %v1528, %v1527
        %v1616 = vpack.c.bf16 %v1530, %v1529
        %v1617 = vpack.c.bf16 %v1532, %v1531
        %v1618 = vpack.c.bf16 %v1534, %v1533
        %v1619 = vpack.c.bf16 %v1536, %v1535
        %v1620 = vpack.c.bf16 %v1538, %v1537
        %v1621 = vpack.c.bf16 %v1540, %v1539
        %v1622 = vpack.c.bf16 %v1542, %v1541
        %v1623 = vpack.c.bf16 %v1544, %v1543
        %v1624 = vpack.c.bf16 %v1546, %v1545
        %v1625 = vpack.c.bf16 %v1548, %v1547
        %v1626 = vpack.c.bf16 %v1550, %v1549
        %v1627 = vpack.c.bf16 %v1552, %v1551
        %v1628 = vpack.c.bf16 %v1554, %v1553
        %v1629 = vpack.c.bf16 %v1556, %v1555
        %v1630 = vpack.c.bf16 %v1558, %v1557
        %v1631 = vpack.c.bf16 %v1560, %v1559
        %v1632 = vpack.c.bf16 %v1562, %v1561
        %v1633 = vpack.c.bf16 %v1564, %v1563
        %v1634 = vpack.c.bf16 %v1566, %v1565
        %v1635 = vpack.c.bf16 %v1568, %v1567
        %v1636 = vpack.c.bf16 %v1570, %v1569
        %v1637 = vpack.c.bf16 %v1572, %v1571
        %v1638 = vld [vmem:[%s791] sm:$0xf]
        %v1639 = vld [vmem:[%s791 + $0x4] sm:$0xf]
        %v1640 = vld [vmem:[%s791 + $0x8] sm:$0xf]
        %v1641 = vld [vmem:[%s791 + $0xc] sm:$0xf]
        %v1642 = vld [vmem:[%s791 + $0x10] sm:$0xf]
        %v1643 = vld [vmem:[%s791 + $0x14] sm:$0xf]
        %v1644 = vld [vmem:[%s791 + $0x18] sm:$0xf]
        %v1645 = vld [vmem:[%s791 + $0x1c] sm:$0xf]
        %v1646 = vld [vmem:[%s791 + $0x20] sm:$0xf]
        %v1647 = vld [vmem:[%s791 + $0x24] sm:$0xf]
        %v1648 = vld [vmem:[%s791 + $0x28] sm:$0xf]
        %v1649 = vld [vmem:[%s791 + $0x2c] sm:$0xf]
        %v1650 = vld [vmem:[%s791 + $0x30] sm:$0xf]
        %v1651 = vld [vmem:[%s791 + $0x34] sm:$0xf]
        %v1652 = vld [vmem:[%s791 + $0x38] sm:$0xf]
        %v1653 = vld [vmem:[%s791 + $0x3c] sm:$0xf]
        %v1654 = vld [vmem:[%s791 + $0x40] sm:$0xf]
        %v1655 = vld [vmem:[%s791 + $0x44] sm:$0xf]
        %v1656 = vld [vmem:[%s791 + $0x48] sm:$0xf]
        %v1657 = vld [vmem:[%s791 + $0x4c] sm:$0xf]
        %v1658 = vld [vmem:[%s791 + $0x50] sm:$0xf]
        %v1659 = vld [vmem:[%s791 + $0x54] sm:$0xf]
        %v1660 = vld [vmem:[%s791 + $0x58] sm:$0xf]
        %v1661 = vld [vmem:[%s791 + $0x5c] sm:$0xf]
        %v1662 = vld [vmem:[%s791 + $0x60] sm:$0xf]
        %v1663 = vld [vmem:[%s791 + $0x64] sm:$0xf]
        %v1664 = vld [vmem:[%s791 + $0x68] sm:$0xf]
        %v1665 = vld [vmem:[%s791 + $0x6c] sm:$0xf]
        %v1666 = vld [vmem:[%s791 + $0x70] sm:$0xf]
        %v1667 = vld [vmem:[%s791 + $0x74] sm:$0xf]
        %v1668 = vld [vmem:[%s791 + $0x78] sm:$0xf]
        %v1669 = vld [vmem:[%s791 + $0x7c] sm:$0xf]
        %v1670 = vld [vmem:[%s791 + $0x80] sm:$0xf]
        %v1671 = vld [vmem:[%s791 + $0x84] sm:$0xf]
        %v1672 = vld [vmem:[%s791 + $0x88] sm:$0xf]
        %v1673 = vld [vmem:[%s791 + $0x8c] sm:$0xf]
        %v1674 = vld [vmem:[%s791 + $0x90] sm:$0xf]
        %v1675 = vld [vmem:[%s791 + $0x94] sm:$0xf]
        %v1676 = vld [vmem:[%s791 + $0x98] sm:$0xf]
        %v1677 = vld [vmem:[%s791 + $0x9c] sm:$0xf]
        %v1678 = vld [vmem:[%s791 + $0xa0] sm:$0xf]
        %v1679 = vld [vmem:[%s791 + $0xa4] sm:$0xf]
        %v1680 = vld [vmem:[%s791 + $0xa8] sm:$0xf]
        %v1681 = vld [vmem:[%s791 + $0xac] sm:$0xf]
        %v1682 = vld [vmem:[%s791 + $0xb0] sm:$0xf]
        %v1683 = vld [vmem:[%s791 + $0xb4] sm:$0xf]
        %v1684 = vld [vmem:[%s791 + $0xb8] sm:$0xf]
        %v1685 = vld [vmem:[%s791 + $0xbc] sm:$0xf]
        %v1686 = vld [vmem:[%s791 + $0xc0] sm:$0xf]
        %v1687 = vld [vmem:[%s791 + $0xc4] sm:$0xf]
        %v1688 = vld [vmem:[%s791 + $0xc8] sm:$0xf]
        %v1689 = vld [vmem:[%s791 + $0xcc] sm:$0xf]
        %v1690 = vld [vmem:[%s791 + $0xd0] sm:$0xf]
        %v1691 = vld [vmem:[%s791 + $0xd4] sm:$0xf]
        %v1692 = vld [vmem:[%s791 + $0xd8] sm:$0xf]
        %v1693 = vld [vmem:[%s791 + $0xdc] sm:$0xf]
        %v1694 = vld [vmem:[%s791 + $0xe0] sm:$0xf]
        %v1695 = vld [vmem:[%s791 + $0xe4] sm:$0xf]
        %v1696 = vld [vmem:[%s791 + $0xe8] sm:$0xf]
        %v1697 = vld [vmem:[%s791 + $0xec] sm:$0xf]
        %v1698 = vld [vmem:[%s791 + $0xf0] sm:$0xf]
        %v1699 = vld [vmem:[%s791 + $0xf4] sm:$0xf]
        %v1700 = vld [vmem:[%s791 + $0xf8] sm:$0xf]
        %v1701 = vld [vmem:[%s791 + $0xfc] sm:$0xf]
        %v1766 = vunpack.c.l.b16 %v1574
        %v1767 = vunpack.c.h.b16 %v1574
        %v1768 = vunpack.c.l.b16 %v1575
        %v1769 = vunpack.c.h.b16 %v1575
        %v1770 = vunpack.c.l.b16 %v1576
        %v1771 = vunpack.c.h.b16 %v1576
        %v1772 = vunpack.c.l.b16 %v1577
        %v1773 = vunpack.c.h.b16 %v1577
        %v1774 = vunpack.c.l.b16 %v1578
        %v1775 = vunpack.c.h.b16 %v1578
        %v1776 = vunpack.c.l.b16 %v1579
        %v1777 = vunpack.c.h.b16 %v1579
        %v1778 = vunpack.c.l.b16 %v1580
        %v1779 = vunpack.c.h.b16 %v1580
        %v1780 = vunpack.c.l.b16 %v1581
        %v1781 = vunpack.c.h.b16 %v1581
        %v1782 = vunpack.c.l.b16 %v1582
        %v1783 = vunpack.c.h.b16 %v1582
        %v1784 = vunpack.c.l.b16 %v1583
        %v1785 = vunpack.c.h.b16 %v1583
        %v1786 = vunpack.c.l.b16 %v1584
        %v1787 = vunpack.c.h.b16 %v1584
        %v1788 = vunpack.c.l.b16 %v1585
        %v1789 = vunpack.c.h.b16 %v1585
        %v1790 = vunpack.c.l.b16 %v1586
        %v1791 = vunpack.c.h.b16 %v1586
        %v1792 = vunpack.c.l.b16 %v1587
        %v1793 = vunpack.c.h.b16 %v1587
        %v1794 = vunpack.c.l.b16 %v1588
        %v1795 = vunpack.c.h.b16 %v1588
        %v1796 = vunpack.c.l.b16 %v1589
        %v1797 = vunpack.c.h.b16 %v1589
        %v1798 = vunpack.c.l.b16 %v1590
        %v1799 = vunpack.c.h.b16 %v1590
        %v1800 = vunpack.c.l.b16 %v1591
        %v1801 = vunpack.c.h.b16 %v1591
        %v1802 = vunpack.c.l.b16 %v1592
        %v1803 = vunpack.c.h.b16 %v1592
        %v1804 = vunpack.c.l.b16 %v1593
        %v1805 = vunpack.c.h.b16 %v1593
        %v1806 = vunpack.c.l.b16 %v1594
        %v1807 = vunpack.c.h.b16 %v1594
        %v1808 = vunpack.c.l.b16 %v1595
        %v1809 = vunpack.c.h.b16 %v1595
        %v1810 = vunpack.c.l.b16 %v1596
        %v1811 = vunpack.c.h.b16 %v1596
        %v1812 = vunpack.c.l.b16 %v1597
        %v1813 = vunpack.c.h.b16 %v1597
        %v1814 = vunpack.c.l.b16 %v1598
        %v1815 = vunpack.c.h.b16 %v1598
        %v1816 = vunpack.c.l.b16 %v1599
        %v1817 = vunpack.c.h.b16 %v1599
        %v1818 = vunpack.c.l.b16 %v1600
        %v1819 = vunpack.c.h.b16 %v1600
        %v1820 = vunpack.c.l.b16 %v1601
        %v1821 = vunpack.c.h.b16 %v1601
        %v1822 = vunpack.c.l.b16 %v1602
        %v1823 = vunpack.c.h.b16 %v1602
        %v1824 = vunpack.c.l.b16 %v1603
        %v1825 = vunpack.c.h.b16 %v1603
        %v1826 = vunpack.c.l.b16 %v1604
        %v1827 = vunpack.c.h.b16 %v1604
        %v1828 = vunpack.c.l.b16 %v1605
        %v1829 = vunpack.c.h.b16 %v1605
        %v1830 = vunpack.c.l.b16 %v1606
        %v1831 = vunpack.c.h.b16 %v1606
        %v1832 = vunpack.c.l.b16 %v1607
        %v1833 = vunpack.c.h.b16 %v1607
        %v1834 = vunpack.c.l.b16 %v1608
        %v1835 = vunpack.c.h.b16 %v1608
        %v1836 = vunpack.c.l.b16 %v1609
        %v1837 = vunpack.c.h.b16 %v1609
        %v1838 = vunpack.c.l.b16 %v1610
        %v1839 = vunpack.c.h.b16 %v1610
        %v1840 = vunpack.c.l.b16 %v1611
        %v1841 = vunpack.c.h.b16 %v1611
        %v1842 = vunpack.c.l.b16 %v1612
        %v1843 = vunpack.c.h.b16 %v1612
        %v1844 = vunpack.c.l.b16 %v1613
        %v1845 = vunpack.c.h.b16 %v1613
        %v1846 = vunpack.c.l.b16 %v1614
        %v1847 = vunpack.c.h.b16 %v1614
        %v1848 = vunpack.c.l.b16 %v1615
        %v1849 = vunpack.c.h.b16 %v1615
        %v1850 = vunpack.c.l.b16 %v1616
        %v1851 = vunpack.c.h.b16 %v1616
        %v1852 = vunpack.c.l.b16 %v1617
        %v1853 = vunpack.c.h.b16 %v1617
        %v1854 = vunpack.c.l.b16 %v1618
        %v1855 = vunpack.c.h.b16 %v1618
        %v1856 = vunpack.c.l.b16 %v1619
        %v1857 = vunpack.c.h.b16 %v1619
        %v1858 = vunpack.c.l.b16 %v1620
        %v1859 = vunpack.c.h.b16 %v1620
        %v1860 = vunpack.c.l.b16 %v1621
        %v1861 = vunpack.c.h.b16 %v1621
        %v1862 = vunpack.c.l.b16 %v1622
        %v1863 = vunpack.c.h.b16 %v1622
        %v1864 = vunpack.c.l.b16 %v1623
        %v1865 = vunpack.c.h.b16 %v1623
        %v1866 = vunpack.c.l.b16 %v1624
        %v1867 = vunpack.c.h.b16 %v1624
        %v1868 = vunpack.c.l.b16 %v1625
        %v1869 = vunpack.c.h.b16 %v1625
        %v1870 = vunpack.c.l.b16 %v1626
        %v1871 = vunpack.c.h.b16 %v1626
        %v1872 = vunpack.c.l.b16 %v1627
        %v1873 = vunpack.c.h.b16 %v1627
        %v1874 = vunpack.c.l.b16 %v1628
        %v1875 = vunpack.c.h.b16 %v1628
        %v1876 = vunpack.c.l.b16 %v1629
        %v1877 = vunpack.c.h.b16 %v1629
        %v1878 = vunpack.c.l.b16 %v1630
        %v1879 = vunpack.c.h.b16 %v1630
        %v1880 = vunpack.c.l.b16 %v1631
        %v1881 = vunpack.c.h.b16 %v1631
        %v1882 = vunpack.c.l.b16 %v1632
        %v1883 = vunpack.c.h.b16 %v1632
        %v1884 = vunpack.c.l.b16 %v1633
        %v1885 = vunpack.c.h.b16 %v1633
        %v1886 = vunpack.c.l.b16 %v1634
        %v1887 = vunpack.c.h.b16 %v1634
        %v1888 = vunpack.c.l.b16 %v1635
        %v1889 = vunpack.c.h.b16 %v1635
        %v1890 = vunpack.c.l.b16 %v1636
        %v1891 = vunpack.c.h.b16 %v1636
        %v1892 = vunpack.c.l.b16 %v1637
        %v1893 = vunpack.c.h.b16 %v1637
        %v1894 = vlaneseq
        %v1895 = vand.u32 %v1894, 127
        %v1896 = vlaneseq
        %v1897 = vshrl.u32 %v1896, 7
        %v1898 = vsub.s32 %v1895, %v1897
        %v1899 = vrot.slane %v1766, %v1898
        %v1900 = vadd.s32 %v1895, 4294967288
        %v1901 = vlaneseq
        %v1902 = vshrl.u32 %v1901, 7
        %v1903 = vsub.s32 %v1900, %v1902
        %v1904 = vrot.slane %v1767, %v1903
        %vm1905 = vcmask 130112
        %v1906 = vsel %vm1905, %v1904, %v1899
        %v1907 = vadd.s32 %v1895, 4294967280
        %v1908 = vlaneseq
        %v1909 = vshrl.u32 %v1908, 7
        %v1910 = vsub.s32 %v1907, %v1909
        %v1911 = vrot.slane %v1768, %v1910
        %vm1912 = vcmask 195712
        %v1913 = vsel %vm1912, %v1911, %v1906
        %v1914 = vadd.s32 %v1895, 4294967272
        %v1915 = vlaneseq
        %v1916 = vshrl.u32 %v1915, 7
        %v1917 = vsub.s32 %v1914, %v1916
        %v1918 = vrot.slane %v1769, %v1917
        %vm1919 = vcmask 261312
        %v1920 = vsel %vm1919, %v1918, %v1913
        %v1921 = vadd.s32 %v1895, 4294967264
        %v1922 = vlaneseq
        %v1923 = vshrl.u32 %v1922, 7
        %v1924 = vsub.s32 %v1921, %v1923
        %v1925 = vrot.slane %v1770, %v1924
        %vm1926 = vcmask 326912
        %v1927 = vsel %vm1926, %v1925, %v1920
        %v1928 = vadd.s32 %v1895, 4294967256
        %v1929 = vlaneseq
        %v1930 = vshrl.u32 %v1929, 7
        %v1931 = vsub.s32 %v1928, %v1930
        %v1932 = vrot.slane %v1771, %v1931
        %vm1933 = vcmask 392512
        %v1934 = vsel %vm1933, %v1932, %v1927
        %v1935 = vadd.s32 %v1895, 4294967248
        %v1936 = vlaneseq
        %v1937 = vshrl.u32 %v1936, 7
        %v1938 = vsub.s32 %v1935, %v1937
        %v1939 = vrot.slane %v1772, %v1938
        %vm1940 = vcmask 458112
        %v1941 = vsel %vm1940, %v1939, %v1934
        %v1942 = vadd.s32 %v1895, 4294967240
        %v1943 = vlaneseq
        %v1944 = vshrl.u32 %v1943, 7
        %v1945 = vsub.s32 %v1942, %v1944
        %v1946 = vrot.slane %v1773, %v1945
        %vm1947 = vcmask 523712
        %v1948 = vsel %vm1947, %v1946, %v1941
        %v1949 = vadd.s32 %v1895, 4294967232
        %v1950 = vlaneseq
        %v1951 = vshrl.u32 %v1950, 7
        %v1952 = vsub.s32 %v1949, %v1951
        %v1953 = vrot.slane %v1774, %v1952
        %vm1954 = vcmask 589312
        %v1955 = vsel %vm1954, %v1953, %v1948
        %v1956 = vadd.s32 %v1895, 4294967224
        %v1957 = vlaneseq
        %v1958 = vshrl.u32 %v1957, 7
        %v1959 = vsub.s32 %v1956, %v1958
        %v1960 = vrot.slane %v1775, %v1959
        %vm1961 = vcmask 654912
        %v1962 = vsel %vm1961, %v1960, %v1955
        %v1963 = vadd.s32 %v1895, 4294967216
        %v1964 = vlaneseq
        %v1965 = vshrl.u32 %v1964, 7
        %v1966 = vsub.s32 %v1963, %v1965
        %v1967 = vrot.slane %v1776, %v1966
        %vm1968 = vcmask 720512
        %v1969 = vsel %vm1968, %v1967, %v1962
        %v1970 = vadd.s32 %v1895, 4294967208
        %v1971 = vlaneseq
        %v1972 = vshrl.u32 %v1971, 7
        %v1973 = vsub.s32 %v1970, %v1972
        %v1974 = vrot.slane %v1777, %v1973
        %vm1975 = vcmask 786112
        %v1976 = vsel %vm1975, %v1974, %v1969
        %v1977 = vadd.s32 %v1895, 4294967200
        %v1978 = vlaneseq
        %v1979 = vshrl.u32 %v1978, 7
        %v1980 = vsub.s32 %v1977, %v1979
        %v1981 = vrot.slane %v1778, %v1980
        %vm1982 = vcmask 851712
        %v1983 = vsel %vm1982, %v1981, %v1976
        %v1984 = vadd.s32 %v1895, 4294967192
        %v1985 = vlaneseq
        %v1986 = vshrl.u32 %v1985, 7
        %v1987 = vsub.s32 %v1984, %v1986
        %v1988 = vrot.slane %v1779, %v1987
        %vm1989 = vcmask 917312
        %v1990 = vsel %vm1989, %v1988, %v1983
        %v1991 = vadd.s32 %v1895, 4294967184
        %v1992 = vlaneseq
        %v1993 = vshrl.u32 %v1992, 7
        %v1994 = vsub.s32 %v1991, %v1993
        %v1995 = vrot.slane %v1780, %v1994
        %vm1996 = vcmask 982912
        %v1997 = vsel %vm1996, %v1995, %v1990
        %v1998 = vadd.s32 %v1895, 4294967176
        %v1999 = vlaneseq
        %v2000 = vshrl.u32 %v1999, 7
        %v2001 = vsub.s32 %v1998, %v2000
        %v2002 = vrot.slane %v1781, %v2001
        %vm2003 = vcmask 1048512
        %v2004 = vsel %vm2003, %v2002, %v1997
        %v2005 = vlaneseq
        %v2006 = vshrl.u32 %v2005, 7
        %v2007 = vsub.s32 %v1895, %v2006
        %v2008 = vrot.slane %v1782, %v2007
        %v2009 = vlaneseq
        %v2010 = vshrl.u32 %v2009, 7
        %v2011 = vsub.s32 %v1900, %v2010
        %v2012 = vrot.slane %v1783, %v2011
        %v2013 = vsel %vm1905, %v2012, %v2008
        %v2014 = vlaneseq
        %v2015 = vshrl.u32 %v2014, 7
        %v2016 = vsub.s32 %v1907, %v2015
        %v2017 = vrot.slane %v1784, %v2016
        %v2018 = vsel %vm1912, %v2017, %v2013
        %v2019 = vlaneseq
        %v2020 = vshrl.u32 %v2019, 7
        %v2021 = vsub.s32 %v1914, %v2020
        %v2022 = vrot.slane %v1785, %v2021
        %v2023 = vsel %vm1919, %v2022, %v2018
        %v2024 = vlaneseq
        %v2025 = vshrl.u32 %v2024, 7
        %v2026 = vsub.s32 %v1921, %v2025
        %v2027 = vrot.slane %v1786, %v2026
        %v2028 = vsel %vm1926, %v2027, %v2023
        %v2029 = vlaneseq
        %v2030 = vshrl.u32 %v2029, 7
        %v2031 = vsub.s32 %v1928, %v2030
        %v2032 = vrot.slane %v1787, %v2031
        %v2033 = vsel %vm1933, %v2032, %v2028
        %v2034 = vlaneseq
        %v2035 = vshrl.u32 %v2034, 7
        %v2036 = vsub.s32 %v1935, %v2035
        %v2037 = vrot.slane %v1788, %v2036
        %v2038 = vsel %vm1940, %v2037, %v2033
        %v2039 = vlaneseq
        %v2040 = vshrl.u32 %v2039, 7
        %v2041 = vsub.s32 %v1942, %v2040
        %v2042 = vrot.slane %v1789, %v2041
        %v2043 = vsel %vm1947, %v2042, %v2038
        %v2044 = vlaneseq
        %v2045 = vshrl.u32 %v2044, 7
        %v2046 = vsub.s32 %v1949, %v2045
        %v2047 = vrot.slane %v1790, %v2046
        %v2048 = vsel %vm1954, %v2047, %v2043
        %v2049 = vlaneseq
        %v2050 = vshrl.u32 %v2049, 7
        %v2051 = vsub.s32 %v1956, %v2050
        %v2052 = vrot.slane %v1791, %v2051
        %v2053 = vsel %vm1961, %v2052, %v2048
        %v2054 = vlaneseq
        %v2055 = vshrl.u32 %v2054, 7
        %v2056 = vsub.s32 %v1963, %v2055
        %v2057 = vrot.slane %v1792, %v2056
        %v2058 = vsel %vm1968, %v2057, %v2053
        %v2059 = vlaneseq
        %v2060 = vshrl.u32 %v2059, 7
        %v2061 = vsub.s32 %v1970, %v2060
        %v2062 = vrot.slane %v1793, %v2061
        %v2063 = vsel %vm1975, %v2062, %v2058
        %v2064 = vlaneseq
        %v2065 = vshrl.u32 %v2064, 7
        %v2066 = vsub.s32 %v1977, %v2065
        %v2067 = vrot.slane %v1794, %v2066
        %v2068 = vsel %vm1982, %v2067, %v2063
        %v2069 = vlaneseq
        %v2070 = vshrl.u32 %v2069, 7
        %v2071 = vsub.s32 %v1984, %v2070
        %v2072 = vrot.slane %v1795, %v2071
        %v2073 = vsel %vm1989, %v2072, %v2068
        %v2074 = vlaneseq
        %v2075 = vshrl.u32 %v2074, 7
        %v2076 = vsub.s32 %v1991, %v2075
        %v2077 = vrot.slane %v1796, %v2076
        %v2078 = vsel %vm1996, %v2077, %v2073
        %v2079 = vlaneseq
        %v2080 = vshrl.u32 %v2079, 7
        %v2081 = vsub.s32 %v1998, %v2080
        %v2082 = vrot.slane %v1797, %v2081
        %v2083 = vsel %vm2003, %v2082, %v2078
        %v2084 = vlaneseq
        %v2085 = vshrl.u32 %v2084, 7
        %v2086 = vsub.s32 %v1895, %v2085
        %v2087 = vrot.slane %v1798, %v2086
        %v2088 = vlaneseq
        %v2089 = vshrl.u32 %v2088, 7
        %v2090 = vsub.s32 %v1900, %v2089
        %v2091 = vrot.slane %v1799, %v2090
        %v2092 = vsel %vm1905, %v2091, %v2087
        %v2093 = vlaneseq
        %v2094 = vshrl.u32 %v2093, 7
        %v2095 = vsub.s32 %v1907, %v2094
        %v2096 = vrot.slane %v1800, %v2095
        %v2097 = vsel %vm1912, %v2096, %v2092
        %v2098 = vlaneseq
        %v2099 = vshrl.u32 %v2098, 7
        %v2100 = vsub.s32 %v1914, %v2099
        %v2101 = vrot.slane %v1801, %v2100
        %v2102 = vsel %vm1919, %v2101, %v2097
        %v2103 = vlaneseq
        %v2104 = vshrl.u32 %v2103, 7
        %v2105 = vsub.s32 %v1921, %v2104
        %v2106 = vrot.slane %v1802, %v2105
        %v2107 = vsel %vm1926, %v2106, %v2102
        %v2108 = vlaneseq
        %v2109 = vshrl.u32 %v2108, 7
        %v2110 = vsub.s32 %v1928, %v2109
        %v2111 = vrot.slane %v1803, %v2110
        %v2112 = vsel %vm1933, %v2111, %v2107
        %v2113 = vlaneseq
        %v2114 = vshrl.u32 %v2113, 7
        %v2115 = vsub.s32 %v1935, %v2114
        %v2116 = vrot.slane %v1804, %v2115
        %v2117 = vsel %vm1940, %v2116, %v2112
        %v2118 = vlaneseq
        %v2119 = vshrl.u32 %v2118, 7
        %v2120 = vsub.s32 %v1942, %v2119
        %v2121 = vrot.slane %v1805, %v2120
        %v2122 = vsel %vm1947, %v2121, %v2117
        %v2123 = vlaneseq
        %v2124 = vshrl.u32 %v2123, 7
        %v2125 = vsub.s32 %v1949, %v2124
        %v2126 = vrot.slane %v1806, %v2125
        %v2127 = vsel %vm1954, %v2126, %v2122
        %v2128 = vlaneseq
        %v2129 = vshrl.u32 %v2128, 7
        %v2130 = vsub.s32 %v1956, %v2129
        %v2131 = vrot.slane %v1807, %v2130
        %v2132 = vsel %vm1961, %v2131, %v2127
        %v2133 = vlaneseq
        %v2134 = vshrl.u32 %v2133, 7
        %v2135 = vsub.s32 %v1963, %v2134
        %v2136 = vrot.slane %v1808, %v2135
        %v2137 = vsel %vm1968, %v2136, %v2132
        %v2138 = vlaneseq
        %v2139 = vshrl.u32 %v2138, 7
        %v2140 = vsub.s32 %v1970, %v2139
        %v2141 = vrot.slane %v1809, %v2140
        %v2142 = vsel %vm1975, %v2141, %v2137
        %v2143 = vlaneseq
        %v2144 = vshrl.u32 %v2143, 7
        %v2145 = vsub.s32 %v1977, %v2144
        %v2146 = vrot.slane %v1810, %v2145
        %v2147 = vsel %vm1982, %v2146, %v2142
        %v2148 = vlaneseq
        %v2149 = vshrl.u32 %v2148, 7
        %v2150 = vsub.s32 %v1984, %v2149
        %v2151 = vrot.slane %v1811, %v2150
        %v2152 = vsel %vm1989, %v2151, %v2147
        %v2153 = vlaneseq
        %v2154 = vshrl.u32 %v2153, 7
        %v2155 = vsub.s32 %v1991, %v2154
        %v2156 = vrot.slane %v1812, %v2155
        %v2157 = vsel %vm1996, %v2156, %v2152
        %v2158 = vlaneseq
        %v2159 = vshrl.u32 %v2158, 7
        %v2160 = vsub.s32 %v1998, %v2159
        %v2161 = vrot.slane %v1813, %v2160
        %v2162 = vsel %vm2003, %v2161, %v2157
        %v2163 = vlaneseq
        %v2164 = vshrl.u32 %v2163, 7
        %v2165 = vsub.s32 %v1895, %v2164
        %v2166 = vrot.slane %v1814, %v2165
        %v2167 = vlaneseq
        %v2168 = vshrl.u32 %v2167, 7
        %v2169 = vsub.s32 %v1900, %v2168
        %v2170 = vrot.slane %v1815, %v2169
        %v2171 = vsel %vm1905, %v2170, %v2166
        %v2172 = vlaneseq
        %v2173 = vshrl.u32 %v2172, 7
        %v2174 = vsub.s32 %v1907, %v2173
        %v2175 = vrot.slane %v1816, %v2174
        %v2176 = vsel %vm1912, %v2175, %v2171
        %v2177 = vlaneseq
        %v2178 = vshrl.u32 %v2177, 7
        %v2179 = vsub.s32 %v1914, %v2178
        %v2180 = vrot.slane %v1817, %v2179
        %v2181 = vsel %vm1919, %v2180, %v2176
        %v2182 = vlaneseq
        %v2183 = vshrl.u32 %v2182, 7
        %v2184 = vsub.s32 %v1921, %v2183
        %v2185 = vrot.slane %v1818, %v2184
        %v2186 = vsel %vm1926, %v2185, %v2181
        %v2187 = vlaneseq
        %v2188 = vshrl.u32 %v2187, 7
        %v2189 = vsub.s32 %v1928, %v2188
        %v2190 = vrot.slane %v1819, %v2189
        %v2191 = vsel %vm1933, %v2190, %v2186
        %v2192 = vlaneseq
        %v2193 = vshrl.u32 %v2192, 7
        %v2194 = vsub.s32 %v1935, %v2193
        %v2195 = vrot.slane %v1820, %v2194
        %v2196 = vsel %vm1940, %v2195, %v2191
        %v2197 = vlaneseq
        %v2198 = vshrl.u32 %v2197, 7
        %v2199 = vsub.s32 %v1942, %v2198
        %v2200 = vrot.slane %v1821, %v2199
        %v2201 = vsel %vm1947, %v2200, %v2196
        %v2202 = vlaneseq
        %v2203 = vshrl.u32 %v2202, 7
        %v2204 = vsub.s32 %v1949, %v2203
        %v2205 = vrot.slane %v1822, %v2204
        %v2206 = vsel %vm1954, %v2205, %v2201
        %v2207 = vlaneseq
        %v2208 = vshrl.u32 %v2207, 7
        %v2209 = vsub.s32 %v1956, %v2208
        %v2210 = vrot.slane %v1823, %v2209
        %v2211 = vsel %vm1961, %v2210, %v2206
        %v2212 = vlaneseq
        %v2213 = vshrl.u32 %v2212, 7
        %v2214 = vsub.s32 %v1963, %v2213
        %v2215 = vrot.slane %v1824, %v2214
        %v2216 = vsel %vm1968, %v2215, %v2211
        %v2217 = vlaneseq
        %v2218 = vshrl.u32 %v2217, 7
        %v2219 = vsub.s32 %v1970, %v2218
        %v2220 = vrot.slane %v1825, %v2219
        %v2221 = vsel %vm1975, %v2220, %v2216
        %v2222 = vlaneseq
        %v2223 = vshrl.u32 %v2222, 7
        %v2224 = vsub.s32 %v1977, %v2223
        %v2225 = vrot.slane %v1826, %v2224
        %v2226 = vsel %vm1982, %v2225, %v2221
        %v2227 = vlaneseq
        %v2228 = vshrl.u32 %v2227, 7
        %v2229 = vsub.s32 %v1984, %v2228
        %v2230 = vrot.slane %v1827, %v2229
        %v2231 = vsel %vm1989, %v2230, %v2226
        %v2232 = vlaneseq
        %v2233 = vshrl.u32 %v2232, 7
        %v2234 = vsub.s32 %v1991, %v2233
        %v2235 = vrot.slane %v1828, %v2234
        %v2236 = vsel %vm1996, %v2235, %v2231
        %v2237 = vlaneseq
        %v2238 = vshrl.u32 %v2237, 7
        %v2239 = vsub.s32 %v1998, %v2238
        %v2240 = vrot.slane %v1829, %v2239
        %v2241 = vsel %vm2003, %v2240, %v2236
        %v2242 = vlaneseq
        %v2243 = vshrl.u32 %v2242, 7
        %v2244 = vsub.s32 %v1895, %v2243
        %v2245 = vrot.slane %v1830, %v2244
        %v2246 = vlaneseq
        %v2247 = vshrl.u32 %v2246, 7
        %v2248 = vsub.s32 %v1900, %v2247
        %v2249 = vrot.slane %v1831, %v2248
        %v2250 = vsel %vm1905, %v2249, %v2245
        %v2251 = vlaneseq
        %v2252 = vshrl.u32 %v2251, 7
        %v2253 = vsub.s32 %v1907, %v2252
        %v2254 = vrot.slane %v1832, %v2253
        %v2255 = vsel %vm1912, %v2254, %v2250
        %v2256 = vlaneseq
        %v2257 = vshrl.u32 %v2256, 7
        %v2258 = vsub.s32 %v1914, %v2257
        %v2259 = vrot.slane %v1833, %v2258
        %v2260 = vsel %vm1919, %v2259, %v2255
        %v2261 = vlaneseq
        %v2262 = vshrl.u32 %v2261, 7
        %v2263 = vsub.s32 %v1921, %v2262
        %v2264 = vrot.slane %v1834, %v2263
        %v2265 = vsel %vm1926, %v2264, %v2260
        %v2266 = vlaneseq
        %v2267 = vshrl.u32 %v2266, 7
        %v2268 = vsub.s32 %v1928, %v2267
        %v2269 = vrot.slane %v1835, %v2268
        %v2270 = vsel %vm1933, %v2269, %v2265
        %v2271 = vlaneseq
        %v2272 = vshrl.u32 %v2271, 7
        %v2273 = vsub.s32 %v1935, %v2272
        %v2274 = vrot.slane %v1836, %v2273
        %v2275 = vsel %vm1940, %v2274, %v2270
        %v2276 = vlaneseq
        %v2277 = vshrl.u32 %v2276, 7
        %v2278 = vsub.s32 %v1942, %v2277
        %v2279 = vrot.slane %v1837, %v2278
        %v2280 = vsel %vm1947, %v2279, %v2275
        %v2281 = vlaneseq
        %v2282 = vshrl.u32 %v2281, 7
        %v2283 = vsub.s32 %v1949, %v2282
        %v2284 = vrot.slane %v1838, %v2283
        %v2285 = vsel %vm1954, %v2284, %v2280
        %v2286 = vlaneseq
        %v2287 = vshrl.u32 %v2286, 7
        %v2288 = vsub.s32 %v1956, %v2287
        %v2289 = vrot.slane %v1839, %v2288
        %v2290 = vsel %vm1961, %v2289, %v2285
        %v2291 = vlaneseq
        %v2292 = vshrl.u32 %v2291, 7
        %v2293 = vsub.s32 %v1963, %v2292
        %v2294 = vrot.slane %v1840, %v2293
        %v2295 = vsel %vm1968, %v2294, %v2290
        %v2296 = vlaneseq
        %v2297 = vshrl.u32 %v2296, 7
        %v2298 = vsub.s32 %v1970, %v2297
        %v2299 = vrot.slane %v1841, %v2298
        %v2300 = vsel %vm1975, %v2299, %v2295
        %v2301 = vlaneseq
        %v2302 = vshrl.u32 %v2301, 7
        %v2303 = vsub.s32 %v1977, %v2302
        %v2304 = vrot.slane %v1842, %v2303
        %v2305 = vsel %vm1982, %v2304, %v2300
        %v2306 = vlaneseq
        %v2307 = vshrl.u32 %v2306, 7
        %v2308 = vsub.s32 %v1984, %v2307
        %v2309 = vrot.slane %v1843, %v2308
        %v2310 = vsel %vm1989, %v2309, %v2305
        %v2311 = vlaneseq
        %v2312 = vshrl.u32 %v2311, 7
        %v2313 = vsub.s32 %v1991, %v2312
        %v2314 = vrot.slane %v1844, %v2313
        %v2315 = vsel %vm1996, %v2314, %v2310
        %v2316 = vlaneseq
        %v2317 = vshrl.u32 %v2316, 7
        %v2318 = vsub.s32 %v1998, %v2317
        %v2319 = vrot.slane %v1845, %v2318
        %v2320 = vsel %vm2003, %v2319, %v2315
        %v2321 = vlaneseq
        %v2322 = vshrl.u32 %v2321, 7
        %v2323 = vsub.s32 %v1895, %v2322
        %v2324 = vrot.slane %v1846, %v2323
        %v2325 = vlaneseq
        %v2326 = vshrl.u32 %v2325, 7
        %v2327 = vsub.s32 %v1900, %v2326
        %v2328 = vrot.slane %v1847, %v2327
        %v2329 = vsel %vm1905, %v2328, %v2324
        %v2330 = vlaneseq
        %v2331 = vshrl.u32 %v2330, 7
        %v2332 = vsub.s32 %v1907, %v2331
        %v2333 = vrot.slane %v1848, %v2332
        %v2334 = vsel %vm1912, %v2333, %v2329
        %v2335 = vlaneseq
        %v2336 = vshrl.u32 %v2335, 7
        %v2337 = vsub.s32 %v1914, %v2336
        %v2338 = vrot.slane %v1849, %v2337
        %v2339 = vsel %vm1919, %v2338, %v2334
        %v2340 = vlaneseq
        %v2341 = vshrl.u32 %v2340, 7
        %v2342 = vsub.s32 %v1921, %v2341
        %v2343 = vrot.slane %v1850, %v2342
        %v2344 = vsel %vm1926, %v2343, %v2339
        %v2345 = vlaneseq
        %v2346 = vshrl.u32 %v2345, 7
        %v2347 = vsub.s32 %v1928, %v2346
        %v2348 = vrot.slane %v1851, %v2347
        %v2349 = vsel %vm1933, %v2348, %v2344
        %v2350 = vlaneseq
        %v2351 = vshrl.u32 %v2350, 7
        %v2352 = vsub.s32 %v1935, %v2351
        %v2353 = vrot.slane %v1852, %v2352
        %v2354 = vsel %vm1940, %v2353, %v2349
        %v2355 = vlaneseq
        %v2356 = vshrl.u32 %v2355, 7
        %v2357 = vsub.s32 %v1942, %v2356
        %v2358 = vrot.slane %v1853, %v2357
        %v2359 = vsel %vm1947, %v2358, %v2354
        %v2360 = vlaneseq
        %v2361 = vshrl.u32 %v2360, 7
        %v2362 = vsub.s32 %v1949, %v2361
        %v2363 = vrot.slane %v1854, %v2362
        %v2364 = vsel %vm1954, %v2363, %v2359
        %v2365 = vlaneseq
        %v2366 = vshrl.u32 %v2365, 7
        %v2367 = vsub.s32 %v1956, %v2366
        %v2368 = vrot.slane %v1855, %v2367
        %v2369 = vsel %vm1961, %v2368, %v2364
        %v2370 = vlaneseq
        %v2371 = vshrl.u32 %v2370, 7
        %v2372 = vsub.s32 %v1963, %v2371
        %v2373 = vrot.slane %v1856, %v2372
        %v2374 = vsel %vm1968, %v2373, %v2369
        %v2375 = vlaneseq
        %v2376 = vshrl.u32 %v2375, 7
        %v2377 = vsub.s32 %v1970, %v2376
        %v2378 = vrot.slane %v1857, %v2377
        %v2379 = vsel %vm1975, %v2378, %v2374
        %v2380 = vlaneseq
        %v2381 = vshrl.u32 %v2380, 7
        %v2382 = vsub.s32 %v1977, %v2381
        %v2383 = vrot.slane %v1858, %v2382
        %v2384 = vsel %vm1982, %v2383, %v2379
        %v2385 = vlaneseq
        %v2386 = vshrl.u32 %v2385, 7
        %v2387 = vsub.s32 %v1984, %v2386
        %v2388 = vrot.slane %v1859, %v2387
        %v2389 = vsel %vm1989, %v2388, %v2384
        %v2390 = vlaneseq
        %v2391 = vshrl.u32 %v2390, 7
        %v2392 = vsub.s32 %v1991, %v2391
        %v2393 = vrot.slane %v1860, %v2392
        %v2394 = vsel %vm1996, %v2393, %v2389
        %v2395 = vlaneseq
        %v2396 = vshrl.u32 %v2395, 7
        %v2397 = vsub.s32 %v1998, %v2396
        %v2398 = vrot.slane %v1861, %v2397
        %v2399 = vsel %vm2003, %v2398, %v2394
        %v2400 = vlaneseq
        %v2401 = vshrl.u32 %v2400, 7
        %v2402 = vsub.s32 %v1895, %v2401
        %v2403 = vrot.slane %v1862, %v2402
        %v2404 = vlaneseq
        %v2405 = vshrl.u32 %v2404, 7
        %v2406 = vsub.s32 %v1900, %v2405
        %v2407 = vrot.slane %v1863, %v2406
        %v2408 = vsel %vm1905, %v2407, %v2403
        %v2409 = vlaneseq
        %v2410 = vshrl.u32 %v2409, 7
        %v2411 = vsub.s32 %v1907, %v2410
        %v2412 = vrot.slane %v1864, %v2411
        %v2413 = vsel %vm1912, %v2412, %v2408
        %v2414 = vlaneseq
        %v2415 = vshrl.u32 %v2414, 7
        %v2416 = vsub.s32 %v1914, %v2415
        %v2417 = vrot.slane %v1865, %v2416
        %v2418 = vsel %vm1919, %v2417, %v2413
        %v2419 = vlaneseq
        %v2420 = vshrl.u32 %v2419, 7
        %v2421 = vsub.s32 %v1921, %v2420
        %v2422 = vrot.slane %v1866, %v2421
        %v2423 = vsel %vm1926, %v2422, %v2418
        %v2424 = vlaneseq
        %v2425 = vshrl.u32 %v2424, 7
        %v2426 = vsub.s32 %v1928, %v2425
        %v2427 = vrot.slane %v1867, %v2426
        %v2428 = vsel %vm1933, %v2427, %v2423
        %v2429 = vlaneseq
        %v2430 = vshrl.u32 %v2429, 7
        %v2431 = vsub.s32 %v1935, %v2430
        %v2432 = vrot.slane %v1868, %v2431
        %v2433 = vsel %vm1940, %v2432, %v2428
        %v2434 = vlaneseq
        %v2435 = vshrl.u32 %v2434, 7
        %v2436 = vsub.s32 %v1942, %v2435
        %v2437 = vrot.slane %v1869, %v2436
        %v2438 = vsel %vm1947, %v2437, %v2433
        %v2439 = vlaneseq
        %v2440 = vshrl.u32 %v2439, 7
        %v2441 = vsub.s32 %v1949, %v2440
        %v2442 = vrot.slane %v1870, %v2441
        %v2443 = vsel %vm1954, %v2442, %v2438
        %v2444 = vlaneseq
        %v2445 = vshrl.u32 %v2444, 7
        %v2446 = vsub.s32 %v1956, %v2445
        %v2447 = vrot.slane %v1871, %v2446
        %v2448 = vsel %vm1961, %v2447, %v2443
        %v2449 = vlaneseq
        %v2450 = vshrl.u32 %v2449, 7
        %v2451 = vsub.s32 %v1963, %v2450
        %v2452 = vrot.slane %v1872, %v2451
        %v2453 = vsel %vm1968, %v2452, %v2448
        %v2454 = vlaneseq
        %v2455 = vshrl.u32 %v2454, 7
        %v2456 = vsub.s32 %v1970, %v2455
        %v2457 = vrot.slane %v1873, %v2456
        %v2458 = vsel %vm1975, %v2457, %v2453
        %v2459 = vlaneseq
        %v2460 = vshrl.u32 %v2459, 7
        %v2461 = vsub.s32 %v1977, %v2460
        %v2462 = vrot.slane %v1874, %v2461
        %v2463 = vsel %vm1982, %v2462, %v2458
        %v2464 = vlaneseq
        %v2465 = vshrl.u32 %v2464, 7
        %v2466 = vsub.s32 %v1984, %v2465
        %v2467 = vrot.slane %v1875, %v2466
        %v2468 = vsel %vm1989, %v2467, %v2463
        %v2469 = vlaneseq
        %v2470 = vshrl.u32 %v2469, 7
        %v2471 = vsub.s32 %v1991, %v2470
        %v2472 = vrot.slane %v1876, %v2471
        %v2473 = vsel %vm1996, %v2472, %v2468
        %v2474 = vlaneseq
        %v2475 = vshrl.u32 %v2474, 7
        %v2476 = vsub.s32 %v1998, %v2475
        %v2477 = vrot.slane %v1877, %v2476
        %v2478 = vsel %vm2003, %v2477, %v2473
        %v2479 = vlaneseq
        %v2480 = vshrl.u32 %v2479, 7
        %v2481 = vsub.s32 %v1895, %v2480
        %v2482 = vrot.slane %v1878, %v2481
        %v2483 = vlaneseq
        %v2484 = vshrl.u32 %v2483, 7
        %v2485 = vsub.s32 %v1900, %v2484
        %v2486 = vrot.slane %v1879, %v2485
        %v2487 = vsel %vm1905, %v2486, %v2482
        %v2488 = vlaneseq
        %v2489 = vshrl.u32 %v2488, 7
        %v2490 = vsub.s32 %v1907, %v2489
        %v2491 = vrot.slane %v1880, %v2490
        %v2492 = vsel %vm1912, %v2491, %v2487
        %v2493 = vlaneseq
        %v2494 = vshrl.u32 %v2493, 7
        %v2495 = vsub.s32 %v1914, %v2494
        %v2496 = vrot.slane %v1881, %v2495
        %v2497 = vsel %vm1919, %v2496, %v2492
        %v2498 = vlaneseq
        %v2499 = vshrl.u32 %v2498, 7
        %v2500 = vsub.s32 %v1921, %v2499
        %v2501 = vrot.slane %v1882, %v2500
        %v2502 = vsel %vm1926, %v2501, %v2497
        %v2503 = vlaneseq
        %v2504 = vshrl.u32 %v2503, 7
        %v2505 = vsub.s32 %v1928, %v2504
        %v2506 = vrot.slane %v1883, %v2505
        %v2507 = vsel %vm1933, %v2506, %v2502
        %v2508 = vlaneseq
        %v2509 = vshrl.u32 %v2508, 7
        %v2510 = vsub.s32 %v1935, %v2509
        %v2511 = vrot.slane %v1884, %v2510
        %v2512 = vsel %vm1940, %v2511, %v2507
        %v2513 = vlaneseq
        %v2514 = vshrl.u32 %v2513, 7
        %v2515 = vsub.s32 %v1942, %v2514
        %v2516 = vrot.slane %v1885, %v2515
        %v2517 = vsel %vm1947, %v2516, %v2512
        %v2518 = vlaneseq
        %v2519 = vshrl.u32 %v2518, 7
        %v2520 = vsub.s32 %v1949, %v2519
        %v2521 = vrot.slane %v1886, %v2520
        %v2522 = vsel %vm1954, %v2521, %v2517
        %v2523 = vlaneseq
        %v2524 = vshrl.u32 %v2523, 7
        %v2525 = vsub.s32 %v1956, %v2524
        %v2526 = vrot.slane %v1887, %v2525
        %v2527 = vsel %vm1961, %v2526, %v2522
        %v2528 = vlaneseq
        %v2529 = vshrl.u32 %v2528, 7
        %v2530 = vsub.s32 %v1963, %v2529
        %v2531 = vrot.slane %v1888, %v2530
        %v2532 = vsel %vm1968, %v2531, %v2527
        %v2533 = vlaneseq
        %v2534 = vshrl.u32 %v2533, 7
        %v2535 = vsub.s32 %v1970, %v2534
        %v2536 = vrot.slane %v1889, %v2535
        %v2537 = vsel %vm1975, %v2536, %v2532
        %v2538 = vlaneseq
        %v2539 = vshrl.u32 %v2538, 7
        %v2540 = vsub.s32 %v1977, %v2539
        %v2541 = vrot.slane %v1890, %v2540
        %v2542 = vsel %vm1982, %v2541, %v2537
        %v2543 = vlaneseq
        %v2544 = vshrl.u32 %v2543, 7
        %v2545 = vsub.s32 %v1984, %v2544
        %v2546 = vrot.slane %v1891, %v2545
        %v2547 = vsel %vm1989, %v2546, %v2542
        %v2548 = vlaneseq
        %v2549 = vshrl.u32 %v2548, 7
        %v2550 = vsub.s32 %v1991, %v2549
        %v2551 = vrot.slane %v1892, %v2550
        %v2552 = vsel %vm1996, %v2551, %v2547
        %v2553 = vlaneseq
        %v2554 = vshrl.u32 %v2553, 7
        %v2555 = vsub.s32 %v1998, %v2554
        %v2556 = vrot.slane %v1893, %v2555
        %v2557 = vsel %vm2003, %v2556, %v2552
        %vm2558 = vcmask 1041409
        %v2559 = vsel %vm2558, %v2320, %v2004
        %v2560 = vsel %vm2558, %v2399, %v2083
        %v2561 = vsel %vm2558, %v2478, %v2162
        %v2562 = vsel %vm2558, %v2557, %v2241
        %v2563 = vpack.c.b16 %v2559, %v2559
        %v2564 = vpack.c.b16 %v2560, %v2560
        %v2565 = vpack.c.b16 %v2561, %v2561
        %v2566 = vpack.c.b16 %v2562, %v2562
        %v2635 = vunpack.c.l.b16 %v1638
        %v2636 = vunpack.c.l.b16 %v1639
        %v2637 = vunpack.c.l.b16 %v1640
        %v2638 = vunpack.c.l.b16 %v1641
        %v2639 = vunpack.c.l.b16 %v1642
        %v2640 = vunpack.c.l.b16 %v1643
        %v2641 = vunpack.c.l.b16 %v1644
        %v2642 = vunpack.c.l.b16 %v1645
        %v2643 = vunpack.c.l.b16 %v1646
        %v2644 = vunpack.c.l.b16 %v1647
        %v2645 = vunpack.c.l.b16 %v1648
        %v2646 = vunpack.c.l.b16 %v1649
        %v2647 = vunpack.c.l.b16 %v1650
        %v2648 = vunpack.c.l.b16 %v1651
        %v2649 = vunpack.c.l.b16 %v1652
        %v2650 = vunpack.c.l.b16 %v1653
        %v2651 = vunpack.c.l.b16 %v1654
        %v2652 = vunpack.c.l.b16 %v1655
        %v2653 = vunpack.c.l.b16 %v1656
        %v2654 = vunpack.c.l.b16 %v1657
        %v2655 = vunpack.c.l.b16 %v1658
        %v2656 = vunpack.c.l.b16 %v1659
        %v2657 = vunpack.c.l.b16 %v1660
        %v2658 = vunpack.c.l.b16 %v1661
        %v2659 = vunpack.c.l.b16 %v1662
        %v2660 = vunpack.c.l.b16 %v1663
        %v2661 = vunpack.c.l.b16 %v1664
        %v2662 = vunpack.c.l.b16 %v1665
        %v2663 = vunpack.c.l.b16 %v1666
        %v2664 = vunpack.c.l.b16 %v1667
        %v2665 = vunpack.c.l.b16 %v1668
        %v2666 = vunpack.c.l.b16 %v1669
        %v2667 = vunpack.c.l.b16 %v1670
        %v2668 = vunpack.c.l.b16 %v1671
        %v2669 = vunpack.c.l.b16 %v1672
        %v2670 = vunpack.c.l.b16 %v1673
        %v2671 = vunpack.c.l.b16 %v1674
        %v2672 = vunpack.c.l.b16 %v1675
        %v2673 = vunpack.c.l.b16 %v1676
        %v2674 = vunpack.c.l.b16 %v1677
        %v2675 = vunpack.c.l.b16 %v1678
        %v2676 = vunpack.c.l.b16 %v1679
        %v2677 = vunpack.c.l.b16 %v1680
        %v2678 = vunpack.c.l.b16 %v1681
        %v2679 = vunpack.c.l.b16 %v1682
        %v2680 = vunpack.c.l.b16 %v1683
        %v2681 = vunpack.c.l.b16 %v1684
        %v2682 = vunpack.c.l.b16 %v1685
        %v2683 = vunpack.c.l.b16 %v1686
        %v2684 = vunpack.c.l.b16 %v1687
        %v2685 = vunpack.c.l.b16 %v1688
        %v2686 = vunpack.c.l.b16 %v1689
        %v2687 = vunpack.c.l.b16 %v1690
        %v2688 = vunpack.c.l.b16 %v1691
        %v2689 = vunpack.c.l.b16 %v1692
        %v2690 = vunpack.c.l.b16 %v1693
        %v2691 = vunpack.c.l.b16 %v1694
        %v2692 = vunpack.c.l.b16 %v1695
        %v2693 = vunpack.c.l.b16 %v1696
        %v2694 = vunpack.c.l.b16 %v1697
        %v2695 = vunpack.c.l.b16 %v1698
        %v2696 = vunpack.c.l.b16 %v1699
        %v2697 = vunpack.c.l.b16 %v1700
        %v2698 = vunpack.c.l.b16 %v1701
        %v2699 = vpack.c.b16 %v2636, %v2635
        %v2700 = vpack.c.b16 %v2638, %v2637
        %v2701 = vpack.c.b16 %v2640, %v2639
        %v2702 = vpack.c.b16 %v2642, %v2641
        %v2703 = vpack.c.b16 %v2644, %v2643
        %v2704 = vpack.c.b16 %v2646, %v2645
        %v2705 = vpack.c.b16 %v2648, %v2647
        %v2706 = vpack.c.b16 %v2650, %v2649
        %v2707 = vpack.c.b16 %v2652, %v2651
        %v2708 = vpack.c.b16 %v2654, %v2653
        %v2709 = vpack.c.b16 %v2656, %v2655
        %v2710 = vpack.c.b16 %v2658, %v2657
        %v2711 = vpack.c.b16 %v2660, %v2659
        %v2712 = vpack.c.b16 %v2662, %v2661
        %v2713 = vpack.c.b16 %v2664, %v2663
        %v2714 = vpack.c.b16 %v2666, %v2665
        %v2715 = vpack.c.b16 %v2668, %v2667
        %v2716 = vpack.c.b16 %v2670, %v2669
        %v2717 = vpack.c.b16 %v2672, %v2671
        %v2718 = vpack.c.b16 %v2674, %v2673
        %v2719 = vpack.c.b16 %v2676, %v2675
        %v2720 = vpack.c.b16 %v2678, %v2677
        %v2721 = vpack.c.b16 %v2680, %v2679
        %v2722 = vpack.c.b16 %v2682, %v2681
        %v2723 = vpack.c.b16 %v2684, %v2683
        %v2724 = vpack.c.b16 %v2686, %v2685
        %v2725 = vpack.c.b16 %v2688, %v2687
        %v2726 = vpack.c.b16 %v2690, %v2689
        %v2727 = vpack.c.b16 %v2692, %v2691
        %v2728 = vpack.c.b16 %v2694, %v2693
        %v2729 = vpack.c.b16 %v2696, %v2695
        %v2730 = vpack.c.b16 %v2698, %v2697
        %2763 = vmatprep.subr.bf16.mxu0 0
        %2764 = vmatpush1.bf16.msra.mxu0 %v2699
        %2765 = vmatprep.subr.bf16.mxu0 0
        %2766 = vmatpush1.bf16.msra.mxu0 %v2700
        %2767 = vmatprep.subr.bf16.mxu0 0
        %2768 = vmatpush1.bf16.msra.mxu0 %v2701
        %2769 = vmatprep.subr.bf16.mxu0 0
        %2770 = vmatpush1.bf16.msra.mxu0 %v2702
        %2771 = vmatprep.subr.bf16.mxu0 0
        %2772 = vmatpush1.bf16.msra.mxu0 %v2703
        %2773 = vmatprep.subr.bf16.mxu0 0
        %2774 = vmatpush1.bf16.msra.mxu0 %v2704
        %2775 = vmatprep.subr.bf16.mxu0 0
        %2776 = vmatpush1.bf16.msra.mxu0 %v2705
        %2777 = vmatprep.subr.bf16.mxu0 0
        %2778 = vmatpush1.bf16.msra.mxu0 %v2706
        %2779 = vmatprep.subr.bf16.mxu0 0
        %2780 = vmatpush1.bf16.msra.mxu0 %v2707
        %2781 = vmatprep.subr.bf16.mxu0 0
        %2782 = vmatpush1.bf16.msra.mxu0 %v2708
        %2783 = vmatprep.subr.bf16.mxu0 0
        %2784 = vmatpush1.bf16.msra.mxu0 %v2709
        %2785 = vmatprep.subr.bf16.mxu0 0
        %2786 = vmatpush1.bf16.msra.mxu0 %v2710
        %2787 = vmatprep.subr.bf16.mxu0 0
        %2788 = vmatpush1.bf16.msra.mxu0 %v2711
        %2789 = vmatprep.subr.bf16.mxu0 0
        %2790 = vmatpush1.bf16.msra.mxu0 %v2712
        %2791 = vmatprep.subr.bf16.mxu0 0
        %2792 = vmatpush1.bf16.msra.mxu0 %v2713
        %2793 = vmatprep.subr.bf16.mxu0 0
        %2794 = vmatpush1.bf16.msra.mxu0 %v2714
        %2795 = vmatprep.mubr.bf16.mxu0 %v2564
        %2796 = vmatmul.mubr.bf16.gmra.mrb[0].mxu0 %v2563
        %v2797 = vpop.f32.mrb[0].mxu0
        %v2798 = vadd.f32 0.0, %v2797
        %v2799 = vpop.f32.mrb[0].mxu0
        %v2800 = vpop.f32.mrb[0].mxu0
        %v2801 = vpop.f32.mrb[0].mxu0
        %2802 = vdwg.mxu0
        %2803 = vmatprep.subr.bf16.mxu0 0
        %2804 = vmatpush1.bf16.msra.mxu0 %v2715
        %2805 = vmatprep.subr.bf16.mxu0 0
        %2806 = vmatpush1.bf16.msra.mxu0 %v2716
        %2807 = vmatprep.subr.bf16.mxu0 0
        %2808 = vmatpush1.bf16.msra.mxu0 %v2717
        %2809 = vmatprep.subr.bf16.mxu0 0
        %2810 = vmatpush1.bf16.msra.mxu0 %v2718
        %2811 = vmatprep.subr.bf16.mxu0 0
        %2812 = vmatpush1.bf16.msra.mxu0 %v2719
        %2813 = vmatprep.subr.bf16.mxu0 0
        %2814 = vmatpush1.bf16.msra.mxu0 %v2720
        %2815 = vmatprep.subr.bf16.mxu0 0
        %2816 = vmatpush1.bf16.msra.mxu0 %v2721
        %2817 = vmatprep.subr.bf16.mxu0 0
        %2818 = vmatpush1.bf16.msra.mxu0 %v2722
        %2819 = vmatprep.subr.bf16.mxu0 0
        %2820 = vmatpush1.bf16.msra.mxu0 %v2723
        %2821 = vmatprep.subr.bf16.mxu0 0
        %2822 = vmatpush1.bf16.msra.mxu0 %v2724
        %2823 = vmatprep.subr.bf16.mxu0 0
        %2824 = vmatpush1.bf16.msra.mxu0 %v2725
        %2825 = vmatprep.subr.bf16.mxu0 0
        %2826 = vmatpush1.bf16.msra.mxu0 %v2726
        %2827 = vmatprep.subr.bf16.mxu0 0
        %2828 = vmatpush1.bf16.msra.mxu0 %v2727
        %2829 = vmatprep.subr.bf16.mxu0 0
        %2830 = vmatpush1.bf16.msra.mxu0 %v2728
        %2831 = vmatprep.subr.bf16.mxu0 0
        %2832 = vmatpush1.bf16.msra.mxu0 %v2729
        %2833 = vmatprep.subr.bf16.mxu0 0
        %2834 = vmatpush1.bf16.msra.mxu0 %v2730
        %2835 = vmatprep.mubr.bf16.mxu0 %v2566
        %2836 = vmatmul.mubr.bf16.gmra.mrb[0].mxu0 %v2565
        %v2837 = vpop.f32.mrb[0].mxu0
        %v2838 = vadd.f32 %v2798, %v2837
        %v2839 = vpop.f32.mrb[0].mxu0
        %v2840 = vpop.f32.mrb[0].mxu0
        %v2841 = vpop.f32.mrb[0].mxu0
        %2842 = vdwg.mxu0
        %v2843 = vadd.f32 %v1573, %v2838
        %2844 = vst [vmem:[#allocation2] sm:$0x3] %v2843
        %p2845 = scmp.eq.s32.totalorder %s21, 3
        // Predicated region
        $region82: #{tpu_custom_call.1} parent=72 // pred_check
          %p2846 = pneg %p2845
        $region83: #{tpu_custom_call.1} parent=72 // pred_check_branch
          %2848 = sbr.rel (%p2846) target = $region85
        $region84: #{tpu_custom_call.1} parent=72 // pred_region
          %v2849 = vld [vmem:[#allocation2] sm:$0x3]
          %v2850 = vld [vmem:[%s2] sm:$0x1]
          %v2852 = vlaneseq
          %v2853 = vshrl.u32 %v2852, 7
          %v2854 = vsub.s32 0, %v2853
          %v2855 = vrot.slane %v2850, %v2854
          %v2857 = vadd.f32 %v2849, %v2855
          %v2858 = vmax.f32 %v2857, 0.0
          %v2859 = vld [vmem:[%s796] sm:$0x3]
          %v2860 = vmul.f32 %v2858, %v2859
          %2861 = vst [vmem:[#allocation4] sm:$0x3] %v2860
        $region85: #{tpu_custom_call.1} parent=72 // pred_fallthru
          _
        // Predicated region
        $region86: #{tpu_custom_call.1} parent=72 // pred_check
          %p2862 = pneg %p147
        $region87: #{tpu_custom_call.1} parent=72 // pred_check_branch
          %2864 = sbr.rel (%p2862) target = $region89
        $region88: #{tpu_custom_call.1} parent=72 // pred_region
          %s2866 = ssub.s32 32, 32
          %2867 = vsyncadd [#allocation5], %s2866
          %s2868 = smul.addr %s20, 32
          %s2869 = scalar_lea.hbm %s4, %s2868
          %s2871 = sshll.u32 [#allocation4], 4
          %s2872 = int_to_ptr.vmem [resolvable:$true] %s2871
          %2874 = dma.vmem_to_hbm [thread:$0]  %s2872, 32, %s2869, [#allocation5]
        $region89: #{tpu_custom_call.1} parent=72 // pred_fallthru
          _
        // Predicated region
        $region90: #{tpu_custom_call.1} parent=72 // pred_check
          %p2875 = pneg %p147
        $region91: #{tpu_custom_call.1} parent=72 // pred_check_branch
          %2877 = sbr.rel (%p2875) target = $region93
        $region92: #{tpu_custom_call.1} parent=72 // pred_region
          %2878 = dma.done [#allocation5], 32
        $region93: #{tpu_custom_call.1} parent=72 // pred_fallthru
          _
      $region73: #{tpu_custom_call.1} parent=5 // pred_fallthru
        _
      %p2879 = scmp.le.s32.totalorder 2, %s11
      // Predicated region
      $region94: #{tpu_custom_call.1} parent=5 // pred_check
        %p2880 = pneg %p2879
      $region95: #{tpu_custom_call.1} parent=5 // pred_check_branch
        %2882 = sbr.rel (%p2880) target = $region97
      $region96: #{tpu_custom_call.1} parent=5 // pred_region
        %s2883 = ssub.s32 %s11, 2
      $region97: #{tpu_custom_call.1} parent=5 // pred_fallthru
        _
    $region6: #{tpu_custom_call.1} parent=1 // loop_footer
      %s15 = sadd.s32 1, %s11
    $region7: #{tpu_custom_call.1} parent=1 // loop_footer_branch
      %10 = sbr.rel target = $region3
    $region8: #{tpu_custom_call.1} parent=1 // loop_exit
      _
    %2884 = vsyncpa [#allocation5], 1
    %s2885 = scalar_lea.sflag [#allocation5], 1
    %2886 = vsyncpa %s2885, 1

</llo_original>
